<compile_context>
chip_gen: v7x
topology: tpu7x:2x2x1
jax: 0.10.0
libtpu: 0.0.40
codegen_flags: <defaults>
</compile_context>

<pallas_src>
import functools
import math

import jax
import jax.numpy as jnp
from jax import lax
from jax.experimental import pallas as pl
from jax.experimental.pallas import tpu as pltpu

TEMPERATURE = 0.1
W1 = 1.0
W2 = 1.0
NEG_INF_PENALTY = 1e9
NORM_EPS = 1e-12  # F.normalize default eps


def _l2_normalize(x):
    # matches F.normalize(x, dim=-1, p=2, eps=1e-12): x / max(||x||, eps)
    ssq = jnp.sum(x * x, axis=-1, keepdims=True)
    return x * lax.rsqrt(jnp.maximum(ssq, NORM_EPS * NORM_EPS))


def _log_softmax(x):
    m = jnp.max(x, axis=-1, keepdims=True)
    s = x - m
    return s - jnp.log(jnp.sum(jnp.exp(s), axis=-1, keepdims=True))


def _norm_chunk(rows):
    """Static row-chunk size for the init-time in-place normalization."""
    if rows <= 256:
        return rows
    for c in (256, 128, 64, 32, 16, 8):
        if rows % c == 0:
            return c
    return rows


def _scale_normalize_inplace(ref, scale):
    """ref <- scale * l2_normalize(ref) row-wise, chunked so the f32 transient is bounded."""
    rows = ref.shape[0]
    chunk = _norm_chunk(rows)
    nchunks = rows // chunk

    def one(r0):
        blk = ref[pl.ds(r0, chunk), :].astype(jnp.float32)
        ref[pl.ds(r0, chunk), :] = (scale * _l2_normalize(blk)).astype(ref.dtype)

    if nchunks <= 1:
        one(0)
    else:
        def body(c, carry):
            one(pl.multiple_of(c * chunk, chunk))
            return carry
        lax.fori_loop(0, nchunks, body, 0)


def _multipos_kernel(scale_ref,            # SMEM (1,) f32 logit_scale
                     v_ref,                # (tq, D)  image_emb row tile (native dtype)
                     vlc_ref,              # (tq, 1)  image labels, row tile, int32
                     vlr_ref,              # (1, Bv)  image labels, int32 (resident)
                     tlr_ref,              # (1, Bt)  text labels, int32 (resident)
                     t_hbm,                # ANY: text_emb (Bt, D), stays in HBM
                     f_hbm,                # ANY: image_feats (Bv, Df), stays in HBM
                     out_ref,              # (1, 128) f32: lanes [loss, img, img_txt, 0...]
                     tn_ref, fn_ref,       # VMEM scratch: scaled+normalized t / f (mm dtype)
                     diag_ref,             # VMEM (tq, Bv) int32: hoisted (col - local_row)
                     img_acc, row_acc,     # VMEM (tq, 1) f32 deferred CE accumulators
                     cmax, cse, cws, ccnt,  # VMEM (1, Bt) f32 online column-softmax stats
                     dma_sem,              # DMA semaphores (2,)
                     ):
    i = pl.program_id(0)
    nsteps = pl.num_programs(0)
    tq = v_ref.shape[0]
    bv = fn_ref.shape[0]
    bt = tn_ref.shape[0]

    @pl.when(i == 0)
    def _init():
        # Pull raw features straight from HBM into the scratch that will hold their
        # normalized + scaled versions -> no duplicate VMEM residency.
        cp_t = pltpu.make_async_copy(t_hbm, tn_ref, dma_sem.at[0])
        cp_f = pltpu.make_async_copy(f_hbm, fn_ref, dma_sem.at[1])
        cp_t.start()
        cp_f.start()
        cp_t.wait()
        cp_f.wait()

        # Fold scalar scales into the resident operands:
        #   tn <- logit_scale * normalize(t)   => lv  = v_tile @ tn.T carries logit_scale
        #   fn <- sqrt(1/T)   * normalize(f)   => lii = f_tile @ fn.T carries 1/T
        _scale_normalize_inplace(tn_ref, scale_ref[0])
        _scale_normalize_inplace(fn_ref, float(math.sqrt(1.0 / TEMPERATURE)))

        # Hoisted diagonal base: element (r, c) is on the self-diagonal at step i
        # iff c - r == i * tq.
        diag_ref[...] = (lax.broadcasted_iota(jnp.int32, (tq, bv), 1)
                         - lax.broadcasted_iota(jnp.int32, (tq, bv), 0))

        img_acc[...] = jnp.zeros_like(img_acc)
        row_acc[...] = jnp.zeros_like(row_acc)
        cmax[...] = jnp.full_like(cmax, -jnp.inf)
        cse[...] = jnp.zeros_like(cse)
        cws[...] = jnp.zeros_like(cws)
        ccnt[...] = jnp.zeros_like(ccnt)

    # Row tile of normalized image embeddings (cast back to the MXU dtype).
    v_tile = _l2_normalize(v_ref[...].astype(jnp.float32)).astype(tn_ref.dtype)
    row0 = pl.multiple_of(i * tq, tq)
    f_tile = fn_ref[pl.ds(row0, tq), :]   # (tq, Df), already normalized + scaled
    # TODO(synk): verify in the bundle dump whether this pl.ds slice materializes a
    #             per-step VMEM copy; if so, stream a (tq, Df) feats row tile instead.

    # Matmuls: contract last dims of both operands (no explicit transpose).
    dn = (((1,), (1,)), ((), ()))
    lv = lax.dot_general(v_tile, tn_ref[...], dn,                 # (tq, Bt) logit_scale*v@t.T
                         preferred_element_type=jnp.float32)
    lii = lax.dot_general(f_tile, fn_ref[...], dn,                # (tq, Bv) (f@f.T)/T
                          preferred_element_type=jnp.float32)

    # Label matrices (int32 compares).
    vlab = (vlc_ref[...] == tlr_ref[...]).astype(jnp.float32)     # (tq, Bt)
    same = vlc_ref[...] == vlr_ref[...]                           # (tq, Bv) bool
    diag = diag_ref[...] == i * tq                                # (tq, Bv) bool

    mask = jnp.where(diag, 0.0, same.astype(jnp.float32))         # positives, self excluded
    lg = jnp.where(diag, lii - NEG_INF_PENALTY, lii)              # self-excluded logits

    # ---- image-image contrastive CE: lane reduce only, deferred sublane reduce ----
    inv_rc = 1.0 / jnp.maximum(jnp.sum(mask, axis=1, keepdims=True), 1.0)
    img_acc[...] = img_acc[...] + inv_rc * jnp.sum(
        mask * _log_softmax(lg), axis=1, keepdims=True)

    # ---- image -> text CE (rows of logits_v) ----
    inv_vc = 1.0 / jnp.maximum(jnp.sum(vlab, axis=1, keepdims=True), 1.0)
    row_acc[...] = row_acc[...] + inv_vc * jnp.sum(
        vlab * _log_softmax(lv), axis=1, keepdims=True)

    # ---- text -> image CE via online column-softmax of logits_v (== logits_t.T) ----
    ccnt[...] = ccnt[...] + jnp.sum(vlab, axis=0, keepdims=True)
    cws[...] = cws[...] + jnp.sum(vlab * lv, axis=0, keepdims=True)
    m_old = cmax[...]
    m_new = jnp.maximum(m_old, jnp.max(lv, axis=0, keepdims=True))
    cse[...] = cse[...] * jnp.exp(m_old - m_new) + jnp.sum(
        jnp.exp(lv - m_new), axis=0, keepdims=True)
    cmax[...] = m_new

    @pl.when(i == nsteps - 1)
    def _finalize():
        img_sum = jnp.sum(img_acc[...], axis=0, keepdims=True)       # (1, 1)
        row_sum = jnp.sum(row_acc[...], axis=0, keepdims=True)       # (1, 1)
        img_loss = (-1.0 / bv) * img_sum
        row_ce = (-1.0 / bv) * row_sum                               # CE(p_v, logits_v)
        lse = cmax[...] + jnp.log(cse[...])                          # (1, Bt) col logsumexp
        cnt = ccnt[...]
        per_col = (cws[...] - cnt * lse) / jnp.maximum(cnt, 1.0)
        col_ce = (-1.0 / bt) * jnp.sum(per_col, axis=1, keepdims=True)  # CE(p_t, logits_t)
        img_txt = 0.5 * (row_ce + col_ce)
        loss = W1 * img_loss + W2 * img_txt

        lane = lax.broadcasted_iota(jnp.int32, out_ref.shape, 1)
        out_ref[...] = jnp.where(lane == 0, loss,
                       jnp.where(lane == 1, img_loss,
                       jnp.where(lane == 2, img_txt, 0.0)))


# ----------------------------- host-side helpers -----------------------------

def _vmem_capacity_bytes():
    try:
        cap = int(pltpu.get_tpu_info().vmem_capacity_bytes)
        if cap > 0:
            return cap
    except Exception:
        pass
    return 64 << 20   # conservative fallback, valid on every generation


def _device_kind():
    try:
        return jax.devices()[0].device_kind.lower()
    except Exception:
        return ""


def _preferred_row_tile():
    kind = _device_kind()
    # v5e: 4x128 MXU + weaker VPU -> 128 keeps (tq, Bv) f32 temporaries / vreg pressure low.
    if ("v5 lite" in kind) or ("v5e" in kind) or ("v5litepod" in kind):
        return 128
    # v6e / v7x: fill the 256-wide MXU M dimension.
    return 256


def _valid_row_tile(bv, tile, dtype):
    if tile == bv:
        return True
    itemsize = jnp.dtype(dtype).itemsize
    min_mult = 8 * max(1, 4 // itemsize)     # 8 for f32, 16 for bf16
    return tile > 0 and bv % tile == 0 and tile % min_mult == 0


def _estimate_vmem_bytes(bv, bt, d, df, tq, itemsize):
    resident = (bt * d + bv * df) * itemsize           # normalized tn / fn scratch (single copy)
    diag = tq * bv * 4                                  # hoisted diag base (int32)
    small = (4 * bt + 2 * tq) * 4                       # column stats + deferred CE accumulators
    streamed = 2 * (tq * d * itemsize + tq * 4)         # double-buffered v tile + label column
    label_rows = 4 * (bv + bt) * 4                      # resident label rows (double-buffered)
    temps = 6 * tq * bv * 4 + 6 * tq * bt * 4           # live per-step f32 temporaries
    init = 4 * max(_norm_chunk(bv) * df, _norm_chunk(bt) * d) * 4   # init-norm f32 transient
    return resident + diag + small + streamed + label_rows + temps + init + (1 << 20)


def _choose_row_tile(bv, bt, d, df, dtype, budget):
    itemsize = jnp.dtype(dtype).itemsize
    prefer = _preferred_row_tile()
    cands = [c for c in (256, 128, 64, 32, 16, 8)
             if c <= min(prefer, bv) and _valid_row_tile(bv, c, dtype)]
    if not cands:
        return bv
    for t in cands:                       # largest first; shrink if the estimate won't fit
        if _estimate_vmem_bytes(bv, bt, d, df, t, itemsize) <= 0.9 * budget:
            return t
    return cands[-1]


@functools.partial(jax.jit, static_argnames=("row_tile", "vmem_limit_bytes"))
def _multipos_call(v_feats, t_feats, feats, v_labels, t_labels, logit_scale,
                   row_tile, vmem_limit_bytes):
    bv, d = v_feats.shape
    bt = t_feats.shape[0]
    df = feats.shape[1]
    mm_dtype = v_feats.dtype

    vl_col = v_labels.astype(jnp.int32).reshape(bv, 1)
    vl_row = v_labels.astype(jnp.int32).reshape(1, bv)
    tl_row = t_labels.astype(jnp.int32).reshape(1, bt)
    scale = logit_scale.astype(jnp.float32).reshape(1)

    grid = (bv // row_tile,)

    grid_spec = pltpu.PrefetchScalarGridSpec(
        num_scalar_prefetch=0,
        grid=grid,
        in_specs=[
            pl.BlockSpec(memory_space=pltpu.MemorySpace.SMEM),   # logit_scale scalar
            pl.BlockSpec((row_tile, d), lambda i: (i, 0)),       # image_emb row tile (streamed)
            pl.BlockSpec((row_tile, 1), lambda i: (i, 0)),       # image labels, row tile
            pl.BlockSpec((1, bv), lambda i: (0, 0)),             # image labels (all, resident)
            pl.BlockSpec((1, bt), lambda i: (0, 0)),             # text labels (all, resident)
            pl.BlockSpec(memory_space=pl.ANY),                   # text_emb: stays in HBM
            pl.BlockSpec(memory_space=pl.ANY),                   # image_feats: stays in HBM
        ],
        out_specs=pl.BlockSpec((1, 128), lambda i: (0, 0)),      # lane-dense scalar slab
        scratch_shapes=[
            pltpu.VMEM((bt, d), mm_dtype),            # logit_scale * normalized text features
            pltpu.VMEM((bv, df), mm_dtype),           # sqrt(1/T) * normalized image features
            pltpu.VMEM((row_tile, bv), jnp.int32),    # hoisted diag base (col - local_row)
            pltpu.VMEM((row_tile, 1), jnp.float32),   # deferred image-image CE accumulator
            pltpu.VMEM((row_tile, 1), jnp.float32),   # deferred image->text CE accumulator
            pltpu.VMEM((1, bt), jnp.float32),         # online column max
            pltpu.VMEM((1, bt), jnp.float32),         # online column sum-exp
            pltpu.VMEM((1, bt), jnp.float32),         # column weighted-logit sum
            pltpu.VMEM((1, bt), jnp.float32),         # column positive count
            pltpu.SemaphoreType.DMA((2,)),            # init-time HBM->VMEM copies
        ],
    )

    out = pl.pallas_call(
        _multipos_kernel,
        out_shape=jax.ShapeDtypeStruct((1, 128), jnp.float32),
        grid_spec=grid_spec,
        compiler_params=pltpu.CompilerParams(
            dimension_semantics=("arbitrary",),   # accumulators carried across row tiles
            vmem_limit_bytes=vmem_limit_bytes,
        ),
    )(scale, v_feats, vl_col, vl_row, tl_row, t_feats, feats)

    return {"loss": out[0, 0], "image_loss": out[0, 1], "img_txt_loss": out[0, 2]}


def multipos_con_loss_mm(v_feats, t_feats, feats, v_labels, t_labels, logit_scale,
                         *, row_tile=None, matmul_dtype=None):
    """Single-device MultiPosConLossMM forward. Returns dict(loss, image_loss, img_txt_loss).

    matmul_dtype: optional override (e.g. jnp.bfloat16) for the MXU operand dtype; f32
    accumulation is always used in-kernel.
    """
    mm_dtype = jnp.dtype(matmul_dtype) if matmul_dtype is not None else jnp.asarray(v_feats).dtype
    v_feats = jnp.asarray(v_feats, mm_dtype)
    t_feats = jnp.asarray(t_feats, mm_dtype)
    feats = jnp.asarray(feats, mm_dtype)

    bv, d = v_feats.shape
    bt = t_feats.shape[0]
    df = feats.shape[1]

    cap = _vmem_capacity_bytes()
    vmem_limit = int(min(max(32 << 20, int(0.85 * cap)), cap))

    if row_tile is None or not _valid_row_tile(bv, row_tile, mm_dtype):
        row_tile = _choose_row_tile(bv, bt, d, df, mm_dtype, vmem_limit)

    return _multipos_call(v_feats, t_feats, feats,
                          jnp.asarray(v_labels), jnp.asarray(t_labels),
                          jnp.asarray(logit_scale, jnp.float32),
                          row_tile=int(row_tile), vmem_limit_bytes=vmem_limit)


# ------------------------------- pure-JAX reference -------------------------------

def _reference(v_feats, t_feats, feats, v_labels, t_labels, logit_scale):
    # pure-JAX replica of the PyTorch forward (world_size == 1)
    def norm(x):
        n = jnp.sqrt(jnp.sum(x * x, axis=-1, keepdims=True))
        return x / jnp.maximum(n, NORM_EPS)

    def ce(p, q):
        m = jnp.max(q, axis=-1, keepdims=True)
        lsm = (q - m) - jnp.log(jnp.sum(jnp.exp(q - m), axis=-1, keepdims=True))
        return -jnp.mean(jnp.sum(p * lsm, axis=-1))

    v = norm(v_feats.astype(jnp.float32))
    t = norm(t_feats.astype(jnp.float32))
    f = norm(feats.astype(jnp.float32))
    logits_v = logit_scale * v @ t.T
    logits_t = logit_scale * t @ v.T
    logits = (f @ f.T) / TEMPERATURE
    vl = v_labels.reshape(-1, 1)
    tl = t_labels.reshape(-1, 1)
    v_lab = (vl == t_labels.reshape(1, -1)).astype(jnp.float32)
    t_lab = (tl == v_labels.reshape(1, -1)).astype(jnp.float32)
    mask = (vl == v_labels.reshape(1, -1)).astype(jnp.float32)
    logits_mask = 1.0 - jnp.eye(mask.shape[0], dtype=jnp.float32)
    mask = mask * logits_mask
    p = mask / jnp.maximum(mask.sum(1, keepdims=True), 1.0)
    lg = logits - (1.0 - logits_mask) * NEG_INF_PENALTY
    lg = lg - jnp.max(lg, axis=-1, keepdims=True)
    img_loss = ce(p, lg)
    p_v = v_lab / jnp.maximum(v_lab.sum(1, keepdims=True), 1.0)
    p_t = t_lab / jnp.maximum(t_lab.sum(1, keepdims=True), 1.0)
    img_txt = (ce(p_v, logits_v) + ce(p_t, logits_t)) / 2.0
    return W1 * img_loss + W2 * img_txt, img_loss, img_txt


if __name__ == "__main__":
    key = jax.random.PRNGKey(0)
    k1, k2, k3 = jax.random.split(key, 3)

    Bt = 8             # number of captions
    IMGS_PER_TXT = 2
    Bv = Bt * IMGS_PER_TXT   # number of images (multiple images per caption)
    D = 32             # embedding dim
    Df = 32            # image-feature dim for the image-image branch

    v_feats = jax.random.normal(k1, (Bv, D), jnp.float32)    # image_emb
    t_feats = jax.random.normal(k2, (Bt, D), jnp.float32)    # text_emb
    feats = jax.random.normal(k3, (Bv, Df), jnp.float32)     # image_feats
    v_labels = jnp.repeat(jnp.arange(Bt, dtype=jnp.int32), IMGS_PER_TXT)  # image_labels
    t_labels = jnp.arange(Bt, dtype=jnp.int32)                            # text_labels
    logit_scale = jnp.float32(1.0 / 0.07)

    # f32 inputs, forced 2-step row grid (row_tile=8) -> exercises the online accumulation,
    # the init-time DMA + in-place chunked normalization, and the hoisted diag base.
    out = multipos_con_loss_mm(v_feats, t_feats, feats, v_labels, t_labels,
                               logit_scale, row_tile=8)
    jax.block_until_ready(out)

    ref_loss, ref_img, ref_it = _reference(
        v_feats, t_feats, feats, v_labels, t_labels, logit_scale)
    assert jnp.allclose(out["loss"], ref_loss, atol=1e-4, rtol=1e-4)
    assert jnp.allclose(out["image_loss"], ref_img, atol=1e-4, rtol=1e-4)
    assert jnp.allclose(out["img_txt_loss"], ref_it, atol=1e-4, rtol=1e-4)

    # bf16 inputs exercise the native-dtype path (bf16 MXU operands, f32 accumulate).
    out_bf = multipos_con_loss_mm(v_feats.astype(jnp.bfloat16),
                                  t_feats.astype(jnp.bfloat16),
                                  feats.astype(jnp.bfloat16),
                                  v_labels, t_labels, logit_scale)
    jax.block_until_ready(out_bf)
    rb_loss, _, _ = _reference(v_feats.astype(jnp.bfloat16).astype(jnp.float32),
                               t_feats.astype(jnp.bfloat16).astype(jnp.float32),
                               feats.astype(jnp.bfloat16).astype(jnp.float32),
                               v_labels, t_labels, logit_scale)
    assert jnp.allclose(out_bf["loss"], rb_loss, atol=1e-1, rtol=1e-1)

    # f32 inputs with the optional bf16-matmul flag (faster MXU, half the resident VMEM).
    out_flag = multipos_con_loss_mm(v_feats, t_feats, feats, v_labels, t_labels,
                                    logit_scale, matmul_dtype=jnp.bfloat16)
    jax.block_until_ready(out_flag)
    assert jnp.allclose(out_flag["loss"], ref_loss, atol=1e-1, rtol=1e-1)

    print("KERNEL_OK")
</pallas_src>

<mosaic_0001>
module attributes {stable_mosaic.version = 11 : i64} {
  func.func @_multipos_kernel(%arg0: i32, %arg1: memref<1xf32, #tpu.memory_space<smem>>, %arg2: memref<8x32xf32, #tpu.memory_space<vmem>>, %arg3: memref<8x1xi32, #tpu.memory_space<vmem>>, %arg4: memref<1x16xi32, #tpu.memory_space<vmem>>, %arg5: memref<1x8xi32, #tpu.memory_space<vmem>>, %arg6: memref<8x32xf32, #tpu.memory_space<any>>, %arg7: memref<16x32xf32, #tpu.memory_space<any>>, %arg8: memref<1x128xf32, #tpu.memory_space<vmem>>, %arg9: memref<8x32xf32, #tpu.memory_space<vmem>>, %arg10: memref<16x32xf32, #tpu.memory_space<vmem>>, %arg11: memref<8x16xi32, #tpu.memory_space<vmem>>, %arg12: memref<8x1xf32, #tpu.memory_space<vmem>>, %arg13: memref<8x1xf32, #tpu.memory_space<vmem>>, %arg14: memref<1x8xf32, #tpu.memory_space<vmem>>, %arg15: memref<1x8xf32, #tpu.memory_space<vmem>>, %arg16: memref<1x8xf32, #tpu.memory_space<vmem>>, %arg17: memref<1x8xf32, #tpu.memory_space<vmem>>, %arg18: memref<2x!tpu.dma_semaphore, #tpu.memory_space<semaphore_mem>>) attributes {dimension_semantics = [#tpu.dimension_semantics<arbitrary>], iteration_bounds = array<i64: 2>, scalar_prefetch = 0 : i64, scratch_operands = 10 : i64, tpu.core_type = #tpu.core_type<tc>, window_params = [{transform_indices = @transform_0, window_bounds = array<i64: 1>}, {transform_indices = @transform_1, window_bounds = array<i64: 8, 32>}, {transform_indices = @transform_2, window_bounds = array<i64: 8, 1>}, {pipeline_mode = #tpu.pipeline_mode<synchronous>, transform_indices = @transform_3, window_bounds = array<i64: 1, 16>}, {pipeline_mode = #tpu.pipeline_mode<synchronous>, transform_indices = @transform_4, window_bounds = array<i64: 1, 8>}, {}, {}, {pipeline_mode = #tpu.pipeline_mode<synchronous>, transform_indices = @transform_7, window_bounds = array<i64: 1, 128>}]} {
    %c0_i32 = arith.constant 0 : i32
    %0 = arith.cmpi eq, %arg0, %c0_i32 : i32
    %1 = arith.extui %0 : i1 to i32
    %c0_i32_0 = arith.constant 0 : i32
    %2 = arith.cmpi ne, %1, %c0_i32_0 : i32
    scf.if %2 {
      %c0_i32_64 = arith.constant 0 : i32
      %119 = tpu.memref_slice %arg18[%c0_i32_64] : memref<2x!tpu.dma_semaphore, #tpu.memory_space<semaphore_mem>> -> memref<1x!tpu.dma_semaphore, #tpu.memory_space<semaphore_mem>>
      %120 = tpu.memref_squeeze %119 : memref<1x!tpu.dma_semaphore, #tpu.memory_space<semaphore_mem>> -> memref<!tpu.dma_semaphore, #tpu.memory_space<semaphore_mem>>
      tpu.enqueue_dma source(%arg6 : memref<8x32xf32, #tpu.memory_space<any>>) target(%arg9 : memref<8x32xf32, #tpu.memory_space<vmem>>) target_semaphore(%120 : memref<!tpu.dma_semaphore, #tpu.memory_space<semaphore_mem>>)
      %c1_i32_65 = arith.constant 1 : i32
      %121 = tpu.memref_slice %arg18[%c1_i32_65] : memref<2x!tpu.dma_semaphore, #tpu.memory_space<semaphore_mem>> -> memref<1x!tpu.dma_semaphore, #tpu.memory_space<semaphore_mem>>
      %122 = tpu.memref_squeeze %121 : memref<1x!tpu.dma_semaphore, #tpu.memory_space<semaphore_mem>> -> memref<!tpu.dma_semaphore, #tpu.memory_space<semaphore_mem>>
      tpu.enqueue_dma source(%arg7 : memref<16x32xf32, #tpu.memory_space<any>>) target(%arg10 : memref<16x32xf32, #tpu.memory_space<vmem>>) target_semaphore(%122 : memref<!tpu.dma_semaphore, #tpu.memory_space<semaphore_mem>>)
      %c0_i32_66 = arith.constant 0 : i32
      %123 = tpu.memref_slice %arg18[%c0_i32_66] : memref<2x!tpu.dma_semaphore, #tpu.memory_space<semaphore_mem>> -> memref<1x!tpu.dma_semaphore, #tpu.memory_space<semaphore_mem>>
      %124 = tpu.memref_squeeze %123 : memref<1x!tpu.dma_semaphore, #tpu.memory_space<semaphore_mem>> -> memref<!tpu.dma_semaphore, #tpu.memory_space<semaphore_mem>>
      tpu.wait_dma2 semaphore(%124 : memref<!tpu.dma_semaphore, #tpu.memory_space<semaphore_mem>>) src(%arg6 : memref<8x32xf32, #tpu.memory_space<any>>) dst(%arg9 : memref<8x32xf32, #tpu.memory_space<vmem>>)
      %c1_i32_67 = arith.constant 1 : i32
      %125 = tpu.memref_slice %arg18[%c1_i32_67] : memref<2x!tpu.dma_semaphore, #tpu.memory_space<semaphore_mem>> -> memref<1x!tpu.dma_semaphore, #tpu.memory_space<semaphore_mem>>
      %126 = tpu.memref_squeeze %125 : memref<1x!tpu.dma_semaphore, #tpu.memory_space<semaphore_mem>> -> memref<!tpu.dma_semaphore, #tpu.memory_space<semaphore_mem>>
      tpu.wait_dma2 semaphore(%126 : memref<!tpu.dma_semaphore, #tpu.memory_space<semaphore_mem>>) src(%arg7 : memref<16x32xf32, #tpu.memory_space<any>>) dst(%arg10 : memref<16x32xf32, #tpu.memory_space<vmem>>)
      %c0_68 = arith.constant 0 : index
      %127 = memref.load %arg1[%c0_68] : memref<1xf32, #tpu.memory_space<smem>>
      %c0_69 = arith.constant 0 : index
      %c0_70 = arith.constant 0 : index
      %128 = vector.load %arg9[%c0_69, %c0_70] : memref<8x32xf32, #tpu.memory_space<vmem>>, vector<8x32xf32>
      %129 = arith.mulf %128, %128 : vector<8x32xf32>
      %cst_71 = arith.constant dense<0.000000e+00> : vector<8xf32>
      %130 = vector.multi_reduction <add>, %129, %cst_71 [1] : vector<8x32xf32> to vector<8xf32>
      %131 = vector.shape_cast %130 : vector<8xf32> to vector<8x1xf32>
      %cst_72 = arith.constant 1.000000e-24 : f32
      %132 = vector.broadcast %cst_72 : f32 to vector<8x1xf32>
      %133 = arith.maximumf %131, %132 : vector<8x1xf32>
      %134 = math.rsqrt %133 : vector<8x1xf32>
      %135 = vector.broadcast %134 : vector<8x1xf32> to vector<8x32xf32>
      %136 = arith.mulf %128, %135 : vector<8x32xf32>
      %137 = vector.broadcast %127 : f32 to vector<8x32xf32>
      %138 = arith.mulf %137, %136 : vector<8x32xf32>
      %c0_73 = arith.constant 0 : index
      %c0_74 = arith.constant 0 : index
      %139 = vector.load %arg9[%c0_73, %c0_74] : memref<8x32xf32, #tpu.memory_space<vmem>>, vector<8x32xf32>
      tpu.vector_store %arg9[%c0_73, %c0_74], %138 {strides = array<i32>} : memref<8x32xf32, #tpu.memory_space<vmem>>, vector<8x32xf32>,
      %c0_75 = arith.constant 0 : index
      %c0_76 = arith.constant 0 : index
      %140 = vector.load %arg10[%c0_75, %c0_76] : memref<16x32xf32, #tpu.memory_space<vmem>>, vector<16x32xf32>
      %141 = arith.mulf %140, %140 : vector<16x32xf32>
      %cst_77 = arith.constant dense<0.000000e+00> : vector<16xf32>
      %142 = vector.multi_reduction <add>, %141, %cst_77 [1] : vector<16x32xf32> to vector<16xf32>
      %143 = vector.shape_cast %142 : vector<16xf32> to vector<16x1xf32>
      %cst_78 = arith.constant 1.000000e-24 : f32
      %144 = vector.broadcast %cst_78 : f32 to vector<16x1xf32>
      %145 = arith.maximumf %143, %144 : vector<16x1xf32>
      %146 = math.rsqrt %145 : vector<16x1xf32>
      %147 = vector.broadcast %146 : vector<16x1xf32> to vector<16x32xf32>
      %148 = arith.mulf %140, %147 : vector<16x32xf32>
      %cst_79 = arith.constant 3.1622777 : f32
      %149 = vector.broadcast %cst_79 : f32 to vector<16x32xf32>
      %150 = arith.mulf %149, %148 : vector<16x32xf32>
      %c0_80 = arith.constant 0 : index
      %c0_81 = arith.constant 0 : index
      %151 = vector.load %arg10[%c0_80, %c0_81] : memref<16x32xf32, #tpu.memory_space<vmem>>, vector<16x32xf32>
      tpu.vector_store %arg10[%c0_80, %c0_81], %150 {strides = array<i32>} : memref<16x32xf32, #tpu.memory_space<vmem>>, vector<16x32xf32>,
      %152 = tpu.iota {dimensions = array<i32: 1>} : vector<8x16xi32>
      %153 = tpu.iota {dimensions = array<i32: 0>} : vector<8x16xi32>
      %154 = arith.subi %152, %153 : vector<8x16xi32>
      %c0_82 = arith.constant 0 : index
      %c0_83 = arith.constant 0 : index
      %155 = vector.load %arg11[%c0_82, %c0_83] : memref<8x16xi32, #tpu.memory_space<vmem>>, vector<8x16xi32>
      tpu.vector_store %arg11[%c0_82, %c0_83], %154 {strides = array<i32>} : memref<8x16xi32, #tpu.memory_space<vmem>>, vector<8x16xi32>,
      %cst_84 = arith.constant 0.000000e+00 : f32
      %156 = vector.broadcast %cst_84 : f32 to vector<8x1xf32>
      %c0_85 = arith.constant 0 : index
      %c0_86 = arith.constant 0 : index
      %157 = vector.load %arg12[%c0_85, %c0_86] : memref<8x1xf32, #tpu.memory_space<vmem>>, vector<8x1xf32>
      tpu.vector_store %arg12[%c0_85, %c0_86], %156 {strides = array<i32>} : memref<8x1xf32, #tpu.memory_space<vmem>>, vector<8x1xf32>,
      %cst_87 = arith.constant 0.000000e+00 : f32
      %158 = vector.broadcast %cst_87 : f32 to vector<8x1xf32>
      %c0_88 = arith.constant 0 : index
      %c0_89 = arith.constant 0 : index
      %159 = vector.load %arg13[%c0_88, %c0_89] : memref<8x1xf32, #tpu.memory_space<vmem>>, vector<8x1xf32>
      tpu.vector_store %arg13[%c0_88, %c0_89], %158 {strides = array<i32>} : memref<8x1xf32, #tpu.memory_space<vmem>>, vector<8x1xf32>,
      %cst_90 = arith.constant 0xFF800000 : f32
      %160 = vector.broadcast %cst_90 : f32 to vector<1x8xf32>
      %c0_91 = arith.constant 0 : index
      %c0_92 = arith.constant 0 : index
      %161 = vector.load %arg14[%c0_91, %c0_92] : memref<1x8xf32, #tpu.memory_space<vmem>>, vector<1x8xf32>
      tpu.vector_store %arg14[%c0_91, %c0_92], %160 {strides = array<i32>} : memref<1x8xf32, #tpu.memory_space<vmem>>, vector<1x8xf32>,
      %cst_93 = arith.constant 0.000000e+00 : f32
      %162 = vector.broadcast %cst_93 : f32 to vector<1x8xf32>
      %c0_94 = arith.constant 0 : index
      %c0_95 = arith.constant 0 : index
      %163 = vector.load %arg15[%c0_94, %c0_95] : memref<1x8xf32, #tpu.memory_space<vmem>>, vector<1x8xf32>
      tpu.vector_store %arg15[%c0_94, %c0_95], %162 {strides = array<i32>} : memref<1x8xf32, #tpu.memory_space<vmem>>, vector<1x8xf32>,
      %cst_96 = arith.constant 0.000000e+00 : f32
      %164 = vector.broadcast %cst_96 : f32 to vector<1x8xf32>
      %c0_97 = arith.constant 0 : index
      %c0_98 = arith.constant 0 : index
      %165 = vector.load %arg16[%c0_97, %c0_98] : memref<1x8xf32, #tpu.memory_space<vmem>>, vector<1x8xf32>
      tpu.vector_store %arg16[%c0_97, %c0_98], %164 {strides = array<i32>} : memref<1x8xf32, #tpu.memory_space<vmem>>, vector<1x8xf32>,
      %cst_99 = arith.constant 0.000000e+00 : f32
      %166 = vector.broadcast %cst_99 : f32 to vector<1x8xf32>
      %c0_100 = arith.constant 0 : index
      %c0_101 = arith.constant 0 : index
      %167 = vector.load %arg17[%c0_100, %c0_101] : memref<1x8xf32, #tpu.memory_space<vmem>>, vector<1x8xf32>
      tpu.vector_store %arg17[%c0_100, %c0_101], %166 {strides = array<i32>} : memref<1x8xf32, #tpu.memory_space<vmem>>, vector<1x8xf32>,
    } else {
    }
    %c0 = arith.constant 0 : index
    %c0_1 = arith.constant 0 : index
    %3 = vector.load %arg2[%c0, %c0_1] : memref<8x32xf32, #tpu.memory_space<vmem>>, vector<8x32xf32>
    %4 = arith.mulf %3, %3 : vector<8x32xf32>
    %cst = arith.constant dense<0.000000e+00> : vector<8xf32>
    %5 = vector.multi_reduction <add>, %4, %cst [1] : vector<8x32xf32> to vector<8xf32>
    %6 = vector.shape_cast %5 : vector<8xf32> to vector<8x1xf32>
    %cst_2 = arith.constant 1.000000e-24 : f32
    %7 = vector.broadcast %cst_2 : f32 to vector<8x1xf32>
    %8 = arith.maximumf %6, %7 : vector<8x1xf32>
    %9 = math.rsqrt %8 : vector<8x1xf32>
    %10 = vector.broadcast %9 : vector<8x1xf32> to vector<8x32xf32>
    %11 = arith.mulf %3, %10 : vector<8x32xf32>
    %c8_i32 = arith.constant 8 : i32
    %12 = arith.muli %arg0, %c8_i32 : i32
    %13 = tpu.assume_multiple %12, 8 : i32
    %14 = arith.index_cast %13 : i32 to index
    %c0_3 = arith.constant 0 : index
    %15 = vector.load %arg10[%14, %c0_3] : memref<16x32xf32, #tpu.memory_space<vmem>>, vector<8x32xf32>
    %c0_4 = arith.constant 0 : index
    %c0_5 = arith.constant 0 : index
    %16 = vector.load %arg9[%c0_4, %c0_5] : memref<8x32xf32, #tpu.memory_space<vmem>>, vector<8x32xf32>
    %cst_6 = arith.constant dense<0.000000e+00> : vector<8x8xf32>
    %17 = tpu.matmul %11, %16, %cst_6 {dimension_numbers = #tpu.dot_dimension_numbers<[1], [1], [0], [0], [0, 0, 1, 0], [], []>} : vector<8x32xf32>, vector<8x32xf32>, vector<8x8xf32> -> vector<8x8xf32>
    %c0_7 = arith.constant 0 : index
    %c0_8 = arith.constant 0 : index
    %18 = vector.load %arg10[%c0_7, %c0_8] : memref<16x32xf32, #tpu.memory_space<vmem>>, vector<16x32xf32>
    %cst_9 = arith.constant dense<0.000000e+00> : vector<8x16xf32>
    %19 = tpu.matmul %15, %18, %cst_9 {dimension_numbers = #tpu.dot_dimension_numbers<[1], [1], [0], [0], [0, 0, 1, 0], [], []>} : vector<8x32xf32>, vector<16x32xf32>, vector<8x16xf32> -> vector<8x16xf32>
    %c0_10 = arith.constant 0 : index
    %c0_11 = arith.constant 0 : index
    %20 = vector.load %arg3[%c0_10, %c0_11] : memref<8x1xi32, #tpu.memory_space<vmem>>, vector<8x1xi32>
    %c0_12 = arith.constant 0 : index
    %c0_13 = arith.constant 0 : index
    %21 = vector.load %arg5[%c0_12, %c0_13] : memref<1x8xi32, #tpu.memory_space<vmem>>, vector<1x8xi32>
    %22 = vector.broadcast %20 : vector<8x1xi32> to vector<8x8xi32>
    %23 = vector.broadcast %21 : vector<1x8xi32> to vector<8x8xi32>
    %24 = arith.cmpi eq, %22, %23 : vector<8x8xi32>
    %25 = arith.extui %24 : vector<8x8xi1> to vector<8x8xi32>
    %26 = arith.sitofp %25 : vector<8x8xi32> to vector<8x8xf32>
    %c0_14 = arith.constant 0 : index
    %c0_15 = arith.constant 0 : index
    %27 = vector.load %arg3[%c0_14, %c0_15] : memref<8x1xi32, #tpu.memory_space<vmem>>, vector<8x1xi32>
    %c0_16 = arith.constant 0 : index
    %c0_17 = arith.constant 0 : index
    %28 = vector.load %arg4[%c0_16, %c0_17] : memref<1x16xi32, #tpu.memory_space<vmem>>, vector<1x16xi32>
    %29 = vector.broadcast %27 : vector<8x1xi32> to vector<8x16xi32>
    %30 = vector.broadcast %28 : vector<1x16xi32> to vector<8x16xi32>
    %31 = arith.cmpi eq, %29, %30 : vector<8x16xi32>
    %c0_18 = arith.constant 0 : index
    %c0_19 = arith.constant 0 : index
    %32 = vector.load %arg11[%c0_18, %c0_19] : memref<8x16xi32, #tpu.memory_space<vmem>>, vector<8x16xi32>
    %c8_i32_20 = arith.constant 8 : i32
    %33 = arith.muli %arg0, %c8_i32_20 : i32
    %34 = vector.broadcast %33 : i32 to vector<8x16xi32>
    %35 = arith.cmpi eq, %32, %34 : vector<8x16xi32>
    %36 = arith.extui %31 : vector<8x16xi1> to vector<8x16xi32>
    %37 = arith.sitofp %36 : vector<8x16xi32> to vector<8x16xf32>
    %cst_21 = arith.constant 0.000000e+00 : f32
    %38 = vector.broadcast %cst_21 : f32 to vector<8x16xf32>
    %39 = arith.select %35, %38, %37 : vector<8x16xi1>, vector<8x16xf32>
    %cst_22 = arith.constant 1.000000e+09 : f32
    %40 = vector.broadcast %cst_22 : f32 to vector<8x16xf32>
    %41 = arith.subf %19, %40 : vector<8x16xf32>
    %42 = arith.select %35, %41, %19 : vector<8x16xi1>, vector<8x16xf32>
    %cst_23 = arith.constant dense<0.000000e+00> : vector<8xf32>
    %43 = vector.multi_reduction <add>, %39, %cst_23 [1] : vector<8x16xf32> to vector<8xf32>
    %44 = vector.shape_cast %43 : vector<8xf32> to vector<8x1xf32>
    %cst_24 = arith.constant 1.000000e+00 : f32
    %45 = vector.broadcast %cst_24 : f32 to vector<8x1xf32>
    %46 = arith.maximumf %44, %45 : vector<8x1xf32>
    %cst_25 = arith.constant 1.000000e+00 : f32
    %47 = vector.broadcast %cst_25 : f32 to vector<8x1xf32>
    %48 = arith.divf %47, %46 : vector<8x1xf32>
    %c0_26 = arith.constant 0 : index
    %c0_27 = arith.constant 0 : index
    %49 = vector.load %arg12[%c0_26, %c0_27] : memref<8x1xf32, #tpu.memory_space<vmem>>, vector<8x1xf32>
    %cst_28 = arith.constant dense<0xFF800000> : vector<8xf32>
    %50 = vector.multi_reduction <maximumf>, %42, %cst_28 [1] : vector<8x16xf32> to vector<8xf32>
    %51 = vector.shape_cast %50 : vector<8xf32> to vector<8x1xf32>
    %52 = vector.broadcast %51 : vector<8x1xf32> to vector<8x16xf32>
    %53 = arith.subf %42, %52 : vector<8x16xf32>
    %54 = math.exp %53 : vector<8x16xf32>
    %cst_29 = arith.constant dense<0.000000e+00> : vector<8xf32>
    %55 = vector.multi_reduction <add>, %54, %cst_29 [1] : vector<8x16xf32> to vector<8xf32>
    %56 = vector.shape_cast %55 : vector<8xf32> to vector<8x1xf32>
    %57 = math.log %56 : vector<8x1xf32>
    %58 = vector.broadcast %57 : vector<8x1xf32> to vector<8x16xf32>
    %59 = arith.subf %53, %58 : vector<8x16xf32>
    %60 = arith.mulf %39, %59 : vector<8x16xf32>
    %cst_30 = arith.constant dense<0.000000e+00> : vector<8xf32>
    %61 = vector.multi_reduction <add>, %60, %cst_30 [1] : vector<8x16xf32> to vector<8xf32>
    %62 = vector.shape_cast %61 : vector<8xf32> to vector<8x1xf32>
    %63 = arith.mulf %48, %62 : vector<8x1xf32>
    %64 = arith.addf %49, %63 : vector<8x1xf32>
    %c0_31 = arith.constant 0 : index
    %c0_32 = arith.constant 0 : index
    %65 = vector.load %arg12[%c0_31, %c0_32] : memref<8x1xf32, #tpu.memory_space<vmem>>, vector<8x1xf32>
    tpu.vector_store %arg12[%c0_31, %c0_32], %64 {strides = array<i32>} : memref<8x1xf32, #tpu.memory_space<vmem>>, vector<8x1xf32>,
    %cst_33 = arith.constant dense<0.000000e+00> : vector<8xf32>
    %66 = vector.multi_reduction <add>, %26, %cst_33 [1] : vector<8x8xf32> to vector<8xf32>
    %67 = vector.shape_cast %66 : vector<8xf32> to vector<8x1xf32>
    %cst_34 = arith.constant 1.000000e+00 : f32
    %68 = vector.broadcast %cst_34 : f32 to vector<8x1xf32>
    %69 = arith.maximumf %67, %68 : vector<8x1xf32>
    %cst_35 = arith.constant 1.000000e+00 : f32
    %70 = vector.broadcast %cst_35 : f32 to vector<8x1xf32>
    %71 = arith.divf %70, %69 : vector<8x1xf32>
    %c0_36 = arith.constant 0 : index
    %c0_37 = arith.constant 0 : index
    %72 = vector.load %arg13[%c0_36, %c0_37] : memref<8x1xf32, #tpu.memory_space<vmem>>, vector<8x1xf32>
    %cst_38 = arith.constant dense<0xFF800000> : vector<8xf32>
    %73 = vector.multi_reduction <maximumf>, %17, %cst_38 [1] : vector<8x8xf32> to vector<8xf32>
    %74 = vector.shape_cast %73 : vector<8xf32> to vector<8x1xf32>
    %75 = vector.broadcast %74 : vector<8x1xf32> to vector<8x8xf32>
    %76 = arith.subf %17, %75 : vector<8x8xf32>
    %77 = math.exp %76 : vector<8x8xf32>
    %cst_39 = arith.constant dense<0.000000e+00> : vector<8xf32>
    %78 = vector.multi_reduction <add>, %77, %cst_39 [1] : vector<8x8xf32> to vector<8xf32>
    %79 = vector.shape_cast %78 : vector<8xf32> to vector<8x1xf32>
    %80 = math.log %79 : vector<8x1xf32>
    %81 = vector.broadcast %80 : vector<8x1xf32> to vector<8x8xf32>
    %82 = arith.subf %76, %81 : vector<8x8xf32>
    %83 = arith.mulf %26, %82 : vector<8x8xf32>
    %cst_40 = arith.constant dense<0.000000e+00> : vector<8xf32>
    %84 = vector.multi_reduction <add>, %83, %cst_40 [1] : vector<8x8xf32> to vector<8xf32>
    %85 = vector.shape_cast %84 : vector<8xf32> to vector<8x1xf32>
    %86 = arith.mulf %71, %85 : vector<8x1xf32>
    %87 = arith.addf %72, %86 : vector<8x1xf32>
    %c0_41 = arith.constant 0 : index
    %c0_42 = arith.constant 0 : index
    %88 = vector.load %arg13[%c0_41, %c0_42] : memref<8x1xf32, #tpu.memory_space<vmem>>, vector<8x1xf32>
    tpu.vector_store %arg13[%c0_41, %c0_42], %87 {strides = array<i32>} : memref<8x1xf32, #tpu.memory_space<vmem>>, vector<8x1xf32>,
    %c0_43 = arith.constant 0 : index
    %c0_44 = arith.constant 0 : index
    %89 = vector.load %arg17[%c0_43, %c0_44] : memref<1x8xf32, #tpu.memory_space<vmem>>, vector<1x8xf32>
    %cst_45 = arith.constant dense<0.000000e+00> : vector<8xf32>
    %90 = vector.multi_reduction <add>, %26, %cst_45 [0] : vector<8x8xf32> to vector<8xf32>
    %91 = vector.shape_cast %90 : vector<8xf32> to vector<1x8xf32>
    %92 = arith.addf %89, %91 : vector<1x8xf32>
    %c0_46 = arith.constant 0 : index
    %c0_47 = arith.constant 0 : index
    %93 = vector.load %arg17[%c0_46, %c0_47] : memref<1x8xf32, #tpu.memory_space<vmem>>, vector<1x8xf32>
    tpu.vector_store %arg17[%c0_46, %c0_47], %92 {strides = array<i32>} : memref<1x8xf32, #tpu.memory_space<vmem>>, vector<1x8xf32>,
    %c0_48 = arith.constant 0 : index
    %c0_49 = arith.constant 0 : index
    %94 = vector.load %arg16[%c0_48, %c0_49] : memref<1x8xf32, #tpu.memory_space<vmem>>, vector<1x8xf32>
    %95 = arith.mulf %26, %17 : vector<8x8xf32>
    %cst_50 = arith.constant dense<0.000000e+00> : vector<8xf32>
    %96 = vector.multi_reduction <add>, %95, %cst_50 [0] : vector<8x8xf32> to vector<8xf32>
    %97 = vector.shape_cast %96 : vector<8xf32> to vector<1x8xf32>
    %98 = arith.addf %94, %97 : vector<1x8xf32>
    %c0_51 = arith.constant 0 : index
    %c0_52 = arith.constant 0 : index
    %99 = vector.load %arg16[%c0_51, %c0_52] : memref<1x8xf32, #tpu.memory_space<vmem>>, vector<1x8xf32>
    tpu.vector_store %arg16[%c0_51, %c0_52], %98 {strides = array<i32>} : memref<1x8xf32, #tpu.memory_space<vmem>>, vector<1x8xf32>,
    %c0_53 = arith.constant 0 : index
    %c0_54 = arith.constant 0 : index
    %100 = vector.load %arg14[%c0_53, %c0_54] : memref<1x8xf32, #tpu.memory_space<vmem>>, vector<1x8xf32>
    %cst_55 = arith.constant dense<0xFF800000> : vector<8xf32>
    %101 = vector.multi_reduction <maximumf>, %17, %cst_55 [0] : vector<8x8xf32> to vector<8xf32>
    %102 = vector.shape_cast %101 : vector<8xf32> to vector<1x8xf32>
    %103 = arith.maximumf %100, %102 : vector<1x8xf32>
    %c0_56 = arith.constant 0 : index
    %c0_57 = arith.constant 0 : index
    %104 = vector.load %arg15[%c0_56, %c0_57] : memref<1x8xf32, #tpu.memory_space<vmem>>, vector<1x8xf32>
    %105 = arith.subf %100, %103 : vector<1x8xf32>
    %106 = math.exp %105 : vector<1x8xf32>
    %107 = arith.mulf %104, %106 : vector<1x8xf32>
    %108 = vector.broadcast %103 : vector<1x8xf32> to vector<8x8xf32>
    %109 = arith.subf %17, %108 : vector<8x8xf32>
    %110 = math.exp %109 : vector<8x8xf32>
    %cst_58 = arith.constant dense<0.000000e+00> : vector<8xf32>
    %111 = vector.multi_reduction <add>, %110, %cst_58 [0] : vector<8x8xf32> to vector<8xf32>
    %112 = vector.shape_cast %111 : vector<8xf32> to vector<1x8xf32>
    %113 = arith.addf %107, %112 : vector<1x8xf32>
    %c0_59 = arith.constant 0 : index
    %c0_60 = arith.constant 0 : index
    %114 = vector.load %arg15[%c0_59, %c0_60] : memref<1x8xf32, #tpu.memory_space<vmem>>, vector<1x8xf32>
    tpu.vector_store %arg15[%c0_59, %c0_60], %113 {strides = array<i32>} : memref<1x8xf32, #tpu.memory_space<vmem>>, vector<1x8xf32>,
    %c0_61 = arith.constant 0 : index
    %c0_62 = arith.constant 0 : index
    %115 = vector.load %arg14[%c0_61, %c0_62] : memref<1x8xf32, #tpu.memory_space<vmem>>, vector<1x8xf32>
    tpu.vector_store %arg14[%c0_61, %c0_62], %103 {strides = array<i32>} : memref<1x8xf32, #tpu.memory_space<vmem>>, vector<1x8xf32>,
    %c1_i32 = arith.constant 1 : i32
    %116 = arith.cmpi eq, %arg0, %c1_i32 : i32
    %117 = arith.extui %116 : i1 to i32
    %c0_i32_63 = arith.constant 0 : i32
    %118 = arith.cmpi ne, %117, %c0_i32_63 : i32
    scf.if %118 {
      %c0_64 = arith.constant 0 : index
      %c0_65 = arith.constant 0 : index
      %119 = vector.load %arg12[%c0_64, %c0_65] : memref<8x1xf32, #tpu.memory_space<vmem>>, vector<8x1xf32>
      %cst_66 = arith.constant dense<0.000000e+00> : vector<1xf32>
      %120 = vector.multi_reduction <add>, %119, %cst_66 [0] : vector<8x1xf32> to vector<1xf32>
      %121 = vector.shape_cast %120 : vector<1xf32> to vector<1x1xf32>
      %c0_67 = arith.constant 0 : index
      %c0_68 = arith.constant 0 : index
      %122 = vector.load %arg13[%c0_67, %c0_68] : memref<8x1xf32, #tpu.memory_space<vmem>>, vector<8x1xf32>
      %cst_69 = arith.constant dense<0.000000e+00> : vector<1xf32>
      %123 = vector.multi_reduction <add>, %122, %cst_69 [0] : vector<8x1xf32> to vector<1xf32>
      %124 = vector.shape_cast %123 : vector<1xf32> to vector<1x1xf32>
      %cst_70 = arith.constant -6.250000e-02 : f32
      %125 = vector.broadcast %cst_70 : f32 to vector<1x1xf32>
      %126 = arith.mulf %125, %121 : vector<1x1xf32>
      %cst_71 = arith.constant -6.250000e-02 : f32
      %127 = vector.broadcast %cst_71 : f32 to vector<1x1xf32>
      %128 = arith.mulf %127, %124 : vector<1x1xf32>
      %c0_72 = arith.constant 0 : index
      %c0_73 = arith.constant 0 : index
      %129 = vector.load %arg14[%c0_72, %c0_73] : memref<1x8xf32, #tpu.memory_space<vmem>>, vector<1x8xf32>
      %c0_74 = arith.constant 0 : index
      %c0_75 = arith.constant 0 : index
      %130 = vector.load %arg15[%c0_74, %c0_75] : memref<1x8xf32, #tpu.memory_space<vmem>>, vector<1x8xf32>
      %131 = math.log %130 : vector<1x8xf32>
      %132 = arith.addf %129, %131 : vector<1x8xf32>
      %c0_76 = arith.constant 0 : index
      %c0_77 = arith.constant 0 : index
      %133 = vector.load %arg17[%c0_76, %c0_77] : memref<1x8xf32, #tpu.memory_space<vmem>>, vector<1x8xf32>
      %c0_78 = arith.constant 0 : index
      %c0_79 = arith.constant 0 : index
      %134 = vector.load %arg16[%c0_78, %c0_79] : memref<1x8xf32, #tpu.memory_space<vmem>>, vector<1x8xf32>
      %135 = arith.mulf %133, %132 : vector<1x8xf32>
      %136 = arith.subf %134, %135 : vector<1x8xf32>
      %cst_80 = arith.constant 1.000000e+00 : f32
      %137 = vector.broadcast %cst_80 : f32 to vector<1x8xf32>
      %138 = arith.maximumf %133, %137 : vector<1x8xf32>
      %139 = arith.divf %136, %138 : vector<1x8xf32>
      %cst_81 = arith.constant dense<0.000000e+00> : vector<1xf32>
      %140 = vector.multi_reduction <add>, %139, %cst_81 [1] : vector<1x8xf32> to vector<1xf32>
      %141 = vector.shape_cast %140 : vector<1xf32> to vector<1x1xf32>
      %cst_82 = arith.constant -1.250000e-01 : f32
      %142 = vector.broadcast %cst_82 : f32 to vector<1x1xf32>
      %143 = arith.mulf %142, %141 : vector<1x1xf32>
      %144 = arith.addf %128, %143 : vector<1x1xf32>
      %cst_83 = arith.constant 5.000000e-01 : f32
      %145 = vector.broadcast %cst_83 : f32 to vector<1x1xf32>
      %146 = arith.mulf %145, %144 : vector<1x1xf32>
      %cst_84 = arith.constant 1.000000e+00 : f32
      %147 = vector.broadcast %cst_84 : f32 to vector<1x1xf32>
      %148 = arith.mulf %147, %126 : vector<1x1xf32>
      %cst_85 = arith.constant 1.000000e+00 : f32
      %149 = vector.broadcast %cst_85 : f32 to vector<1x1xf32>
      %150 = arith.mulf %149, %146 : vector<1x1xf32>
      %151 = arith.addf %148, %150 : vector<1x1xf32>
      %152 = tpu.iota {dimensions = array<i32: 1>} : vector<1x128xi32>
      %c0_i32_86 = arith.constant 0 : i32
      %153 = vector.broadcast %c0_i32_86 : i32 to vector<1x128xi32>
      %154 = arith.cmpi eq, %152, %153 : vector<1x128xi32>
      %c1_i32_87 = arith.constant 1 : i32
      %155 = vector.broadcast %c1_i32_87 : i32 to vector<1x128xi32>
      %156 = arith.cmpi eq, %152, %155 : vector<1x128xi32>
      %c2_i32 = arith.constant 2 : i32
      %157 = vector.broadcast %c2_i32 : i32 to vector<1x128xi32>
      %158 = arith.cmpi eq, %152, %157 : vector<1x128xi32>
      %cst_88 = arith.constant 0.000000e+00 : f32
      %159 = vector.shape_cast %146 : vector<1x1xf32> to vector<1x1xf32>
      %160 = vector.broadcast %159 : vector<1x1xf32> to vector<1x128xf32>
      %161 = vector.broadcast %cst_88 : f32 to vector<1x128xf32>
      %162 = arith.select %158, %160, %161 : vector<1x128xi1>, vector<1x128xf32>
      %163 = vector.shape_cast %126 : vector<1x1xf32> to vector<1x1xf32>
      %164 = vector.broadcast %163 : vector<1x1xf32> to vector<1x128xf32>
      %165 = arith.select %156, %164, %162 : vector<1x128xi1>, vector<1x128xf32>
      %166 = vector.shape_cast %151 : vector<1x1xf32> to vector<1x1xf32>
      %167 = vector.broadcast %166 : vector<1x1xf32> to vector<1x128xf32>
      %168 = arith.select %154, %167, %165 : vector<1x128xi1>, vector<1x128xf32>
      %c0_89 = arith.constant 0 : index
      %c0_90 = arith.constant 0 : index
      %169 = vector.load %arg8[%c0_89, %c0_90] : memref<1x128xf32, #tpu.memory_space<vmem>>, vector<1x128xf32>
      tpu.vector_store %arg8[%c0_89, %c0_90], %168 {strides = array<i32>} : memref<1x128xf32, #tpu.memory_space<vmem>>, vector<1x128xf32>,
    } else {
    }
    return
  }
  func.func @transform_0(%arg0: i32) -> i32 {
    %c0_i32 = arith.constant 0 : i32
    %c0_i32_0 = arith.constant 0 : i32
    return %c0_i32 : i32
  }
  func.func @transform_1(%arg0: i32) -> (i32, i32) {
    %c0_i32 = arith.constant 0 : i32
    %c0_i32_0 = arith.constant 0 : i32
    return %arg0, %c0_i32 : i32, i32
  }
  func.func @transform_2(%arg0: i32) -> (i32, i32) {
    %c0_i32 = arith.constant 0 : i32
    %c0_i32_0 = arith.constant 0 : i32
    return %arg0, %c0_i32 : i32, i32
  }
  func.func @transform_3(%arg0: i32) -> (i32, i32) {
    %c0_i32 = arith.constant 0 : i32
    %c0_i32_0 = arith.constant 0 : i32
    %c0_i32_1 = arith.constant 0 : i32
    return %c0_i32, %c0_i32_0 : i32, i32
  }
  func.func @transform_4(%arg0: i32) -> (i32, i32) {
    %c0_i32 = arith.constant 0 : i32
    %c0_i32_0 = arith.constant 0 : i32
    %c0_i32_1 = arith.constant 0 : i32
    return %c0_i32, %c0_i32_0 : i32, i32
  }
  func.func @transform_7(%arg0: i32) -> (i32, i32) {
    %c0_i32 = arith.constant 0 : i32
    %c0_i32_0 = arith.constant 0 : i32
    %c0_i32_1 = arith.constant 0 : i32
    return %c0_i32, %c0_i32_0 : i32, i32
  }
}

</mosaic_0001>

<llo_original>
// kernel: _multipos_call.1
$region0: #{_multipos_call.1}
  #allocation0 [shape = 'u32[]', space=smem, size = 0x4, offset = 0x4, fixed_abs, tag = 'smem constant byte address 0x4 - core index']
  #allocation1 [shape = 'u32[144,128]{1,0:T(1,128)}', space=vmem, size = 0x12000, scoped, tag = 'internal scratch']
  #allocation2 [shape = 'f32[8,32]{1,0:T(8,128)}', space=vmem, size = 0x1000, scoped, tag = 'scratch operand']
  #allocation3 [shape = 'f32[16,32]{1,0:T(8,128)}', space=vmem, size = 0x2000, scoped, tag = 'scratch operand']
  #allocation4 [shape = 's32[8,16]{1,0:T(8,128)}', space=vmem, size = 0x1000, scoped, tag = 'scratch operand']
  #allocation5 [shape = 'f32[8,1]{1,0:T(8,128)}', space=vmem, size = 0x1000, scoped, tag = 'scratch operand']
  #allocation6 [shape = 'f32[8,1]{1,0:T(8,128)}', space=vmem, size = 0x1000, scoped, tag = 'scratch operand']
  #allocation7 [shape = 'f32[1,8]{1,0:T(1,128)}', space=vmem, size = 0x200, scoped, tag = 'scratch operand']
  #allocation8 [shape = 'f32[1,8]{1,0:T(1,128)}', space=vmem, size = 0x200, scoped, tag = 'scratch operand']
  #allocation9 [shape = 'f32[1,8]{1,0:T(1,128)}', space=vmem, size = 0x200, scoped, tag = 'scratch operand']
  #allocation10 [shape = 'f32[1,8]{1,0:T(1,128)}', space=vmem, size = 0x200, scoped, tag = 'scratch operand']
  #allocation11 [shape = 's32[2]{0}', space=sflag, size = 0x8, scoped, tag = 'scratch operand']
  #allocation12 [shape = 'f32[1]{0:T(128)S(6)}', space=smem, size = 0x200, scoped, tag = 'scoped memory for _multipos_call.1']
  #allocation13 [shape = 's32[]', space=sflag, size = 0x4, offset = 0, fixed_abs, tag = 'sflag constant byte address 0x0 - dummy sync flag']
  #allocation14 [shape = 's32[]', space=sflag, size = 0x4, offset = 0, fixed_abs, tag = 'sflag constant byte address 0x0 - dummy sync flag']
  #allocation15 [shape = 'u32[]', space=smem, size = 0x4, offset = 0x44, fixed_abs, tag = 'smem constant byte address 0x44 - assertion arg 0']
  #allocation16 [shape = 'u32[]', space=smem, size = 0x4, offset = 0x48, fixed_abs, tag = 'smem constant byte address 0x48 - assertion arg 1']
  #allocation17 [shape = 's32[]', space=sflag, size = 0x4, offset = 0, fixed_abs, tag = 'sflag constant byte address 0x0 - dummy sync flag']
  %s0 = inlined_call_operand.<no memory space> [shape: f32[1], index: 0, kind: input, shape index: {}]
  %s1 = inlined_call_operand.vmem [shape: f32[16,32], index: 1, kind: input, shape index: {}]
  %s2 = inlined_call_operand.vmem [shape: s32[16,1], index: 2, kind: input, shape index: {}]
  %s3 = inlined_call_operand.vmem [shape: s32[1,16], index: 3, kind: input, shape index: {}]
  %s4 = inlined_call_operand.vmem [shape: s32[1,8], index: 4, kind: input, shape index: {}]
  %s5 = inlined_call_operand.hbm [shape: f32[8,32], index: 5, kind: input, shape index: {}]
  %s6 = inlined_call_operand.vmem [shape: f32[16,32], index: 6, kind: input, shape index: {}]
  %s7 = inlined_call_operand.vmem [shape: f32[1,128], index: 7, kind: output, shape index: {}]
  %s8 = sld [smem:[#allocation0]]
  $region99: #{_multipos_call.1} parent=0
    _
  %s10 = ssub.s32 1, %s8
  %s11 = scalar_select 0, %s10, %s8
  %12 = sst [smem:[#allocation12]] %s0
  loop: start=0, step=1, limit=4
  $region2: #{_multipos_call.1} parent=0 // loop_pre_header
    _
  $region3: #{_multipos_call.1} parent=0 // loop_header
    %s14 = sphi 0, %s18
    %p15 = scmp.ge.s32.totalorder %s14, 4
    %s22 = sphi 0, %s22
    %s24 = sphi 0, %s22
    %s25 = sphi 0, %s24
    %s39 = sphi 0, %s25
    %s45 = sphi 0, %s47
    %s48 = sphi 0, %s45
    %s49 = sphi 0, %s48
    %s65 = sphi 0, %s49
    %s71 = sphi 0, %s73
    %s74 = sphi 0, %s71
    %s75 = sphi 0, %s74
    %s91 = sphi 0, %s75
    %s95 = sphi 0, %s95
    %s97 = sphi 0, %s95
    %s98 = sphi 0, %s97
    %s112 = sphi 0, %s98
    %s116 = sphi 0, %s116
    %s118 = sphi 0, %s116
    %s119 = sphi 0, %s118
    %s133 = sphi 0, %s119
    %s137 = sphi 0, %s137
    %s139 = sphi 0, %s137
    %s140 = sphi 0, %s139
    %s154 = sphi 0, %s140
  $region4: #{_multipos_call.1} parent=0 // loop_header_branch
    %17 = sbr.rel (%p15) target = $region8
  $region5: #{_multipos_call.1} parent=0 // loop_body
    %s19 = ssub.s32 %s14, 1
    %s20 = ssub.s32 %s14, 2
    %s21 = sadd.s32 %s14, 1
    %s23 = sadd.s32 %s22, 1
    %p26 = scmp.eq.s32.totalorder %s14, 1
    %p27 = scmp.ne.s32.totalorder %s22, %s24
    %p28 = scmp.eq.s32.totalorder %s14, 0
    %p29 = por %p27, %p28
    %p30 = scmp.ne.s32.totalorder %s22, %s24
    %p31 = scmp.eq.s32.totalorder %s19, 1
    %p32 = por %p30, %p31
    %p33 = scmp.ne.s32.totalorder %s24, %s25
    %p34 = scmp.eq.s32.totalorder %s19, 0
    %p35 = por %p33, %p34
    %p36 = scmp.ne.s32.totalorder %s24, %s25
    %p37 = scmp.eq.s32.totalorder %s20, 1
    %p38 = por %p36, %p37
    %p40 = scmp.ne.s32.totalorder %s25, %s39
    %p41 = scmp.eq.s32.totalorder %s20, 0
    %p42 = por %p40, %p41
    %s43 = ssub.s32 %s14, %s21
    %p44 = scmp.eq.s32.totalorder %s43, 0
    %s46 = sadd.s32 %s45, 1
    %s47 = scalar_select %p44, %s45, %s46
    %p50 = pneg %p44
    %p51 = scmp.eq.s32.totalorder %s14, 1
    %p52 = por %p50, %p51
    %p53 = scmp.ne.s32.totalorder %s45, %s48
    %p54 = scmp.eq.s32.totalorder %s14, 0
    %p55 = por %p53, %p54
    %p56 = scmp.ne.s32.totalorder %s45, %s48
    %p57 = scmp.eq.s32.totalorder %s19, 1
    %p58 = por %p56, %p57
    %p59 = scmp.ne.s32.totalorder %s48, %s49
    %p60 = scmp.eq.s32.totalorder %s19, 0
    %p61 = por %p59, %p60
    %p62 = scmp.ne.s32.totalorder %s48, %s49
    %p63 = scmp.eq.s32.totalorder %s20, 1
    %p64 = por %p62, %p63
    %p66 = scmp.ne.s32.totalorder %s49, %s65
    %p67 = scmp.eq.s32.totalorder %s20, 0
    %p68 = por %p66, %p67
    %s69 = ssub.s32 %s14, %s21
    %p70 = scmp.eq.s32.totalorder %s69, 0
    %s72 = sadd.s32 %s71, 1
    %s73 = scalar_select %p70, %s71, %s72
    %p76 = pneg %p70
    %p77 = scmp.eq.s32.totalorder %s14, 1
    %p78 = por %p76, %p77
    %p79 = scmp.ne.s32.totalorder %s71, %s74
    %p80 = scmp.eq.s32.totalorder %s14, 0
    %p81 = por %p79, %p80
    %p82 = scmp.ne.s32.totalorder %s71, %s74
    %p83 = scmp.eq.s32.totalorder %s19, 1
    %p84 = por %p82, %p83
    %p85 = scmp.ne.s32.totalorder %s74, %s75
    %p86 = scmp.eq.s32.totalorder %s19, 0
    %p87 = por %p85, %p86
    %p88 = scmp.ne.s32.totalorder %s74, %s75
    %p89 = scmp.eq.s32.totalorder %s20, 1
    %p90 = por %p88, %p89
    %p92 = scmp.ne.s32.totalorder %s75, %s91
    %p93 = scmp.eq.s32.totalorder %s20, 0
    %p94 = por %p92, %p93
    %s96 = sadd.s32 %s95, 1
    %p99 = scmp.eq.s32.totalorder %s14, 1
    %p100 = scmp.ne.s32.totalorder %s95, %s97
    %p101 = scmp.eq.s32.totalorder %s14, 0
    %p102 = por %p100, %p101
    %p103 = scmp.ne.s32.totalorder %s95, %s97
    %p104 = scmp.eq.s32.totalorder %s19, 1
    %p105 = por %p103, %p104
    %p106 = scmp.ne.s32.totalorder %s97, %s98
    %p107 = scmp.eq.s32.totalorder %s19, 0
    %p108 = por %p106, %p107
    %p109 = scmp.ne.s32.totalorder %s97, %s98
    %p110 = scmp.eq.s32.totalorder %s20, 1
    %p111 = por %p109, %p110
    %p113 = scmp.ne.s32.totalorder %s98, %s112
    %p114 = scmp.eq.s32.totalorder %s20, 0
    %p115 = por %p113, %p114
    %s117 = sadd.s32 %s116, 1
    %p120 = scmp.eq.s32.totalorder %s14, 1
    %p121 = scmp.ne.s32.totalorder %s116, %s118
    %p122 = scmp.eq.s32.totalorder %s14, 0
    %p123 = por %p121, %p122
    %p124 = scmp.ne.s32.totalorder %s116, %s118
    %p125 = scmp.eq.s32.totalorder %s19, 1
    %p126 = por %p124, %p125
    %p127 = scmp.ne.s32.totalorder %s118, %s119
    %p128 = scmp.eq.s32.totalorder %s19, 0
    %p129 = por %p127, %p128
    %p130 = scmp.ne.s32.totalorder %s118, %s119
    %p131 = scmp.eq.s32.totalorder %s20, 1
    %p132 = por %p130, %p131
    %p134 = scmp.ne.s32.totalorder %s119, %s133
    %p135 = scmp.eq.s32.totalorder %s20, 0
    %p136 = por %p134, %p135
    %s138 = sadd.s32 %s137, 1
    %p141 = scmp.eq.s32.totalorder %s14, 1
    %p142 = scmp.ne.s32.totalorder %s137, %s139
    %p143 = scmp.eq.s32.totalorder %s14, 0
    %p144 = por %p142, %p143
    %p145 = scmp.ne.s32.totalorder %s137, %s139
    %p146 = scmp.eq.s32.totalorder %s19, 1
    %p147 = por %p145, %p146
    %p148 = scmp.ne.s32.totalorder %s139, %s140
    %p149 = scmp.eq.s32.totalorder %s19, 0
    %p150 = por %p148, %p149
    %p151 = scmp.ne.s32.totalorder %s139, %s140
    %p152 = scmp.eq.s32.totalorder %s20, 1
    %p153 = por %p151, %p152
    %p155 = scmp.ne.s32.totalorder %s140, %s154
    %p156 = scmp.eq.s32.totalorder %s20, 0
    %p157 = por %p155, %p156
    %p158 = scmp.le.s32.totalorder 1, %s14
    %p159 = scmp.lt.s32.totalorder %s14, 3
    %p160 = pnand %p158, %p159
    %p161 = pneg %p160
    // Predicated region
    $region9: #{_multipos_call.1} parent=5 // pred_check
      _
    $region10: #{_multipos_call.1} parent=5 // pred_check_branch
      %163 = sbr.rel (%p160) target = $region12
    $region11: #{_multipos_call.1} parent=5 // pred_region
      %s164 = ssub.s32 %s14, 1
      // Predicated region
      $region13: #{_multipos_call.1} parent=11 // pred_check
        %p165 = pneg %p35
      $region14: #{_multipos_call.1} parent=11 // pred_check_branch
        %167 = sbr.rel (%p165) target = $region16
      $region15: #{_multipos_call.1} parent=11 // pred_region
        _
      $region16: #{_multipos_call.1} parent=11 // pred_fallthru
        _
      // Predicated region
      $region17: #{_multipos_call.1} parent=11 // pred_check
        %p168 = pneg %p108
      $region18: #{_multipos_call.1} parent=11 // pred_check_branch
        %170 = sbr.rel (%p168) target = $region20
      $region19: #{_multipos_call.1} parent=11 // pred_region
        _
      $region20: #{_multipos_call.1} parent=11 // pred_fallthru
        _
      // Predicated region
      $region21: #{_multipos_call.1} parent=11 // pred_check
        %p171 = pneg %p129
      $region22: #{_multipos_call.1} parent=11 // pred_check_branch
        %173 = sbr.rel (%p171) target = $region24
      $region23: #{_multipos_call.1} parent=11 // pred_region
        _
      $region24: #{_multipos_call.1} parent=11 // pred_fallthru
        _
    $region12: #{_multipos_call.1} parent=5 // pred_fallthru
      _
    %p174 = scmp.lt.s32.totalorder %s14, 2
    // Predicated region
    $region25: #{_multipos_call.1} parent=5 // pred_check
      %p175 = pneg %p174
    $region26: #{_multipos_call.1} parent=5 // pred_check_branch
      %177 = sbr.rel (%p175) target = $region28
    $region27: #{_multipos_call.1} parent=5 // pred_region
      // Predicated region
      $region29: #{_multipos_call.1} parent=27 // pred_check
        %p178 = pneg %p55
      $region30: #{_multipos_call.1} parent=27 // pred_check_branch
        %180 = sbr.rel (%p178) target = $region32
      $region31: #{_multipos_call.1} parent=27 // pred_region
        %p181 = scmp.lt.s32.totalorder %s14, 1
        %s182 = scalar_select %p181, %s14, 1
        %s183 = smul.addr %s182, 8
        %s184 = scalar_lea.vmem %s1, %s183
      $region32: #{_multipos_call.1} parent=27 // pred_fallthru
        _
      // Predicated region
      $region33: #{_multipos_call.1} parent=27 // pred_check
        %p185 = pneg %p81
      $region34: #{_multipos_call.1} parent=27 // pred_check_branch
        %187 = sbr.rel (%p185) target = $region36
      $region35: #{_multipos_call.1} parent=27 // pred_region
        %p188 = scmp.lt.s32.totalorder %s14, 1
        %s189 = scalar_select %p188, %s14, 1
        %s190 = smul.addr %s189, 8
        %s191 = scalar_lea.vmem %s2, %s190
      $region36: #{_multipos_call.1} parent=27 // pred_fallthru
        _
    $region28: #{_multipos_call.1} parent=5 // pred_fallthru
      _
    %p192 = scmp.le.s32.totalorder 1, %s14
    %p193 = scmp.lt.s32.totalorder %s14, 3
    %p194 = pnand %p192, %p193
    %p195 = pneg %p194
    // Predicated region
    $region37: #{_multipos_call.1} parent=5 // pred_check
      _
    $region38: #{_multipos_call.1} parent=5 // pred_check_branch
      %197 = sbr.rel (%p194) target = $region40
    $region39: #{_multipos_call.1} parent=5 // pred_region
      %s198 = ssub.s32 %s14, 1
      %p199 = pneg %p35
      %p200 = pneg %p32
      %p201 = scmp.lt.s32.totalorder %s19, 1
      %s202 = scalar_select %p201, %s19, 1
      %s203 = smul.addr %s202, 8
      %s204 = scalar_lea.vmem %s1, %s203
      %p205 = pneg %p61
      %p206 = pneg %p58
      %p207 = scmp.lt.s32.totalorder %s19, 1
      %s208 = scalar_select %p207, %s19, 1
      %s209 = smul.addr %s208, 8
      %s210 = scalar_lea.vmem %s2, %s209
      %p211 = pneg %p87
      %p212 = pneg %p84
      %p213 = pneg %p108
      %p214 = pneg %p105
      %p215 = pneg %p129
      %p216 = pneg %p126
      %p217 = pneg %p150
      %p218 = pneg %p147
      %p219 = scmp.lt.s32.totalorder %s19, 1
      %s220 = scalar_select %p219, %s19, 1
      %s221 = smul.addr %s220, 8
      %s222 = scalar_lea.vmem %s1, %s221
      %p223 = scmp.lt.s32.totalorder %s19, 1
      %s224 = scalar_select %p223, %s19, 1
      %s225 = smul.addr %s224, 8
      %s226 = scalar_lea.vmem %s2, %s225
      %p227 = scmp.eq.s32.totalorder %s19, 0
      // Predicated region
      $region41: #{_multipos_call.1} parent=39 // pred_check
        %p228 = pneg %p227
      $region42: #{_multipos_call.1} parent=39 // pred_check_branch
        %230 = sbr.rel (%p228) target = $region44
      $region43: #{_multipos_call.1} parent=39 // pred_region
        // Predicated region
        $region45: #{_multipos_call.1} parent=43 // pred_check
          _
        $region46: #{_multipos_call.1} parent=43 // pred_check_branch
          %232 = sbr.rel target = $region48
        $region47: #{_multipos_call.1} parent=43 // pred_region
          %233 = sst [smem:[#allocation15]] [#allocation14]
          %234 = sst [smem:[#allocation16]] [#allocation13]
        $region48: #{_multipos_call.1} parent=43 // pred_fallthru
          _
        %236 = shalt.err (0)
        %s238 = sshll.u32 [#allocation2], 4
        %s239 = int_to_ptr.vmem [resolvable:$true] %s238
        %241 = dma.hbm_to_vmem [thread:$0]  %s5, 128, %s239, [#allocation11]
        %s242 = scalar_lea.sflag [#allocation11], 1
        %p244 = scmp.lt.u32.totalorder 16, 8
        %p245 = pneg %p244
        // Predicated region
        $region49: #{_multipos_call.1} parent=43 // pred_check
          _
        $region50: #{_multipos_call.1} parent=43 // pred_check_branch
          %247 = sbr.rel (%p244) target = $region52
        $region51: #{_multipos_call.1} parent=43 // pred_region
          %s262 = sand.u32 16, 7
          %p263 = scmp.eq.s32.totalorder %s262, 0
          // Predicated region
          $region64: #{_multipos_call.1} parent=51 // pred_check
            %p264 = pneg %p263
          $region65: #{_multipos_call.1} parent=51 // pred_check_branch
            %266 = sbr.rel (%p264) target = $region67
          $region66: #{_multipos_call.1} parent=51 // pred_region
            loop: start=0, step=1, limit=1
            $region68: #{_multipos_call.1} parent=66 // loop_pre_header
              _
            $region69: #{_multipos_call.1} parent=66 // loop_header
              %s268 = sphi 0, %s272
              %p269 = scmp.ge.s32.totalorder %s268, 1
              %s273 = sphi %s6, %s6
              %s274 = sphi [#allocation3], [#allocation3]
            $region70: #{_multipos_call.1} parent=66 // loop_header_branch
              %271 = sbr.rel (%p269) target = $region74
            $region71: #{_multipos_call.1} parent=66 // loop_body
              %v275 = vld [vmem:[%s273] sm:$0xff]
              %276 = vst [vmem:[%s274] sm:$0xff] %v275
              %v277 = vld [vmem:[%s273 + $0x8] sm:$0xff]
              %278 = vst [vmem:[%s274 + $0x8] sm:$0xff] %v277
            $region72: #{_multipos_call.1} parent=66 // loop_footer
              %s272 = sadd.s32 1, %s268
            $region73: #{_multipos_call.1} parent=66 // loop_footer_branch
              %267 = sbr.rel target = $region69
            $region74: #{_multipos_call.1} parent=66 // loop_exit
              _
          $region67: #{_multipos_call.1} parent=51 // pred_fallthru
            _
          %p279 = pneg %p263
          // Predicated region
          $region75: #{_multipos_call.1} parent=51 // pred_check
            _
          $region76: #{_multipos_call.1} parent=51 // pred_check_branch
            %281 = sbr.rel (%p263) target = $region78
          $region77: #{_multipos_call.1} parent=51 // pred_region
            %s282 = sand.u32 16, 7
          $region78: #{_multipos_call.1} parent=51 // pred_fallthru
            _
        $region52: #{_multipos_call.1} parent=43 // pred_fallthru
          _
        // Predicated region
        $region53: #{_multipos_call.1} parent=43 // pred_check
          %p248 = pneg %p244
        $region54: #{_multipos_call.1} parent=43 // pred_check_branch
          %250 = sbr.rel (%p248) target = $region56
        $region55: #{_multipos_call.1} parent=43 // pred_region
          %s251 = sshllo.u32 0, 16
          loop: start=0, step=1, limit=1
          $region57: #{_multipos_call.1} parent=55 // loop_pre_header
            _
          $region58: #{_multipos_call.1} parent=55 // loop_header
            %s253 = sphi 0, %s257
            %p254 = scmp.ge.s32.totalorder %s253, 1
            %s258 = sphi %s6, %s6
            %s259 = sphi [#allocation3], [#allocation3]
          $region59: #{_multipos_call.1} parent=55 // loop_header_branch
            %256 = sbr.rel (%p254) target = $region63
          $region60: #{_multipos_call.1} parent=55 // loop_body
            %v260 = vld [vmem:[%s258] sm:%s251]
            %261 = vst [vmem:[%s259] sm:%s251] %v260
          $region61: #{_multipos_call.1} parent=55 // loop_footer
            %s257 = sadd.s32 1, %s253
          $region62: #{_multipos_call.1} parent=55 // loop_footer_branch
            %252 = sbr.rel target = $region58
          $region63: #{_multipos_call.1} parent=55 // loop_exit
            _
        $region56: #{_multipos_call.1} parent=43 // pred_fallthru
          _
        // Predicated region
        $region79: #{_multipos_call.1} parent=43 // pred_check
          _
        $region80: #{_multipos_call.1} parent=43 // pred_check_branch
          %285 = sbr.rel (0) target = $region82
        $region81: #{_multipos_call.1} parent=43 // pred_region
          %286 = vsyncadd %s242, 256
        $region82: #{_multipos_call.1} parent=43 // pred_fallthru
          _
        %s287 = smul.u32 8, 1
        %s288 = sshll.u32 %s287, 4
        %289 = dma.done [#allocation11], %s288
        %s290 = smul.u32 16, 1
        %s291 = sshll.u32 %s290, 4
        %292 = dma.done %s242, %s291
        %s293 = sld [smem:[#allocation12]]
        %v294 = vld [vmem:[#allocation2] sm:$0xff]
        %v295 = vmul.f32 %v294, %v294
        %vm296 = vcmask 261120
        %v297 = vsel %vm296, %v295, 0.0
        %298 = vadd.xlane.f32.xlu0 %v297
        %v299 = vpop.xlane.xlu0 %298
        %v300 = vmax.f32 %v299, 1e-24
        %v301 = vrsqrt.pop %v300
        %v302 = vmul.f32 %v294, %v301
        %v303 = vstv %s293
        %v304 = vmul.f32 %v303, %v302
        %305 = vst.msk [vmem:[#allocation2] sm:$0xff] %vm296, %v304
        %v306 = vld [vmem:[#allocation3] sm:$0xff]
        %v307 = vld [vmem:[#allocation3 + $0x8] sm:$0xff]
        %v308 = vmul.f32 %v306, %v306
        %v309 = vmul.f32 %v307, %v307
        %v310 = vsel %vm296, %v308, 0.0
        %311 = vadd.xlane.f32.xlu0 %v310
        %v312 = vpop.xlane.xlu0 %311
        %v313 = vsel %vm296, %v309, 0.0
        %314 = vadd.xlane.f32.xlu0 %v313
        %v315 = vpop.xlane.xlu0 %314
        %v316 = vmax.f32 %v312, 1e-24
        %v317 = vmax.f32 %v315, 1e-24
        %v318 = vrsqrt.pop %v316
        %v319 = vrsqrt.pop %v317
        %v320 = vmul.f32 %v306, %v318
        %v321 = vmul.f32 %v307, %v319
        %v322 = vmul.f32 %v320, 3.1622777
        %v323 = vmul.f32 %v321, 3.1622777
        %324 = vst.msk [vmem:[#allocation3] sm:$0xff] %vm296, %v322
        %325 = vst.msk [vmem:[#allocation3 + $0x8] sm:$0xff] %vm296, %v323
        %v326 = vlaneseq
        %v327 = vand.u32 %v326, 127
        %v328 = vlaneseq
        %v329 = vshrl.u32 %v328, 7
        %v330 = vsub.s32 %v327, %v329
        %vm331 = vcmask 130048
        %332 = vst.msk [vmem:[#allocation4] sm:$0xff] %vm331, %v330
        %vm333 = vcmask 7168
        %334 = vst.msk [vmem:[#allocation5] sm:$0xff] %vm333, 0.0
        %335 = vst.msk [vmem:[#allocation6] sm:$0xff] %vm333, 0.0
        %vm336 = vcmask 57344
        %337 = vst.msk [vmem:[#allocation7] sm:$0x1] %vm336, -inf
        %338 = vst.msk [vmem:[#allocation8] sm:$0x1] %vm336, 0.0
        %339 = vst.msk [vmem:[#allocation9] sm:$0x1] %vm336, 0.0
        %340 = vst.msk [vmem:[#allocation10] sm:$0x1] %vm336, 0.0
      $region44: #{_multipos_call.1} parent=39 // pred_fallthru
        _
      %v341 = vld [vmem:[%s222] sm:$0xff]
      %v342 = vmul.f32 %v341, %v341
      %vm343 = vcmask 261120
      %v344 = vsel %vm343, %v342, 0.0
      %345 = vadd.xlane.f32.xlu0 %v344
      %v346 = vpop.xlane.xlu0 %345
      %v347 = vmax.f32 %v346, 1e-24
      %v348 = vrsqrt.pop %v347
      %v349 = vmul.f32 %v341, %v348
      %s350 = smul.u32 %s19, 8
      %s351 = scalar_lea.vmem [#allocation3], %s350
      %v352 = vld [vmem:[%s351] sm:$0xff]
      %v353 = vld [vmem:[#allocation2] sm:$0xff]
      %v355 = vsel %vm343, %v349, 0
      %v358 = vsel %vm343, %v353, 0
      %360 = vmatprep.subr.mxu0 0.0
      %361 = vmatpush1.xpose.msra.mxu0 %v358
      %362 = vmatprep.subr.mxu0 0.0
      %363 = vmatpush1.xpose.msra.mxu0 0.0
      %364 = vmatprep.subr.mxu0 0.0
      %365 = vmatpush1.xpose.msra.mxu0 0.0
      %366 = vmatprep.subr.mxu0 0.0
      %367 = vmatpush1.xpose.msra.mxu0 0.0
      %368 = vmatprep.subr.mxu0 0.0
      %369 = vmatpush1.xpose.msra.mxu0 0.0
      %370 = vmatprep.subr.mxu0 0.0
      %371 = vmatpush1.xpose.msra.mxu0 0.0
      %372 = vmatprep.subr.mxu0 0.0
      %373 = vmatpush1.xpose.msra.mxu0 0.0
      %374 = vmatprep.subr.mxu0 0.0
      %375 = vmatpush1.xpose.msra.mxu0 0.0
      %376 = vmatprep.subr.mxu0 0.0
      %377 = vmatpush1.xpose.msra.mxu0 0.0
      %378 = vmatprep.subr.mxu0 0.0
      %379 = vmatpush1.xpose.msra.mxu0 0.0
      %380 = vmatprep.subr.mxu0 0.0
      %381 = vmatpush1.xpose.msra.mxu0 0.0
      %382 = vmatprep.subr.mxu0 0.0
      %383 = vmatpush1.xpose.msra.mxu0 0.0
      %384 = vmatprep.subr.mxu0 0.0
      %385 = vmatpush1.xpose.msra.mxu0 0.0
      %386 = vmatprep.subr.mxu0 0.0
      %387 = vmatpush1.xpose.msra.mxu0 0.0
      %388 = vmatprep.subr.mxu0 0.0
      %389 = vmatpush1.xpose.msra.mxu0 0.0
      %390 = vmatprep.subr.mxu0 0.0
      %391 = vmatpush1.xpose.msra.mxu0 0.0
      %392 = vmatprep.subr.mxu0 0.0
      %393 = vmatpush1.xpose.msra.mxu0 0.0
      %394 = vmatprep.subr.mxu0 0.0
      %395 = vmatpush1.xpose.msra.mxu0 0.0
      %396 = vmatprep.subr.mxu0 0.0
      %397 = vmatpush1.xpose.msra.mxu0 0.0
      %398 = vmatprep.subr.mxu0 0.0
      %399 = vmatpush1.xpose.msra.mxu0 0.0
      %400 = vmatprep.subr.mxu0 0.0
      %401 = vmatpush1.xpose.msra.mxu0 0.0
      %402 = vmatprep.subr.mxu0 0.0
      %403 = vmatpush1.xpose.msra.mxu0 0.0
      %404 = vmatprep.subr.mxu0 0.0
      %405 = vmatpush1.xpose.msra.mxu0 0.0
      %406 = vmatprep.subr.mxu0 0.0
      %407 = vmatpush1.xpose.msra.mxu0 0.0
      %408 = vmatprep.subr.mxu0 0.0
      %409 = vmatpush1.xpose.msra.mxu0 0.0
      %410 = vmatprep.subr.mxu0 0.0
      %411 = vmatpush1.xpose.msra.mxu0 0.0
      %412 = vmatprep.subr.mxu0 0.0
      %413 = vmatpush1.xpose.msra.mxu0 0.0
      %414 = vmatprep.subr.mxu0 0.0
      %415 = vmatpush1.xpose.msra.mxu0 0.0
      %416 = vmatprep.subr.mxu0 0.0
      %417 = vmatpush1.xpose.msra.mxu0 0.0
      %418 = vmatprep.subr.mxu0 0.0
      %419 = vmatpush1.xpose.msra.mxu0 0.0
      %420 = vmatprep.subr.mxu0 0.0
      %421 = vmatpush1.xpose.msra.mxu0 0.0
      %422 = vmatprep.subr.mxu0 0.0
      %423 = vmatpush1.xpose.msra.mxu0 0.0
      %424 = vmatprep.mubr.f32.mxu0 0.0
      %425 = vmatmul.mubr.f32.gmra.mrb[0].mxu0 %v355
      %v426 = vpop.f32.mrb[0].mxu0
      %v427 = vadd.f32 0.0, %v426
      %v428 = vpop.f32.mrb[0].mxu0
      %429 = vdwg.mxu0
      %v430 = vld [vmem:[#allocation3] sm:$0xff]
      %v431 = vld [vmem:[#allocation3 + $0x8] sm:$0xff]
      %v433 = vsel %vm343, %v352, 0
      %v436 = vsel %vm343, %v430, 0
      %v439 = vsel %vm343, %v431, 0
      %441 = vmatprep.subr.mxu0 0.0
      %442 = vmatpush1.xpose.msra.mxu0 %v436
      %443 = vmatprep.subr.mxu0 0.0
      %444 = vmatpush1.xpose.msra.mxu0 %v439
      %445 = vmatprep.subr.mxu0 0.0
      %446 = vmatpush1.xpose.msra.mxu0 0.0
      %447 = vmatprep.subr.mxu0 0.0
      %448 = vmatpush1.xpose.msra.mxu0 0.0
      %449 = vmatprep.subr.mxu0 0.0
      %450 = vmatpush1.xpose.msra.mxu0 0.0
      %451 = vmatprep.subr.mxu0 0.0
      %452 = vmatpush1.xpose.msra.mxu0 0.0
      %453 = vmatprep.subr.mxu0 0.0
      %454 = vmatpush1.xpose.msra.mxu0 0.0
      %455 = vmatprep.subr.mxu0 0.0
      %456 = vmatpush1.xpose.msra.mxu0 0.0
      %457 = vmatprep.subr.mxu0 0.0
      %458 = vmatpush1.xpose.msra.mxu0 0.0
      %459 = vmatprep.subr.mxu0 0.0
      %460 = vmatpush1.xpose.msra.mxu0 0.0
      %461 = vmatprep.subr.mxu0 0.0
      %462 = vmatpush1.xpose.msra.mxu0 0.0
      %463 = vmatprep.subr.mxu0 0.0
      %464 = vmatpush1.xpose.msra.mxu0 0.0
      %465 = vmatprep.subr.mxu0 0.0
      %466 = vmatpush1.xpose.msra.mxu0 0.0
      %467 = vmatprep.subr.mxu0 0.0
      %468 = vmatpush1.xpose.msra.mxu0 0.0
      %469 = vmatprep.subr.mxu0 0.0
      %470 = vmatpush1.xpose.msra.mxu0 0.0
      %471 = vmatprep.subr.mxu0 0.0
      %472 = vmatpush1.xpose.msra.mxu0 0.0
      %473 = vmatprep.subr.mxu0 0.0
      %474 = vmatpush1.xpose.msra.mxu0 0.0
      %475 = vmatprep.subr.mxu0 0.0
      %476 = vmatpush1.xpose.msra.mxu0 0.0
      %477 = vmatprep.subr.mxu0 0.0
      %478 = vmatpush1.xpose.msra.mxu0 0.0
      %479 = vmatprep.subr.mxu0 0.0
      %480 = vmatpush1.xpose.msra.mxu0 0.0
      %481 = vmatprep.subr.mxu0 0.0
      %482 = vmatpush1.xpose.msra.mxu0 0.0
      %483 = vmatprep.subr.mxu0 0.0
      %484 = vmatpush1.xpose.msra.mxu0 0.0
      %485 = vmatprep.subr.mxu0 0.0
      %486 = vmatpush1.xpose.msra.mxu0 0.0
      %487 = vmatprep.subr.mxu0 0.0
      %488 = vmatpush1.xpose.msra.mxu0 0.0
      %489 = vmatprep.subr.mxu0 0.0
      %490 = vmatpush1.xpose.msra.mxu0 0.0
      %491 = vmatprep.subr.mxu0 0.0
      %492 = vmatpush1.xpose.msra.mxu0 0.0
      %493 = vmatprep.subr.mxu0 0.0
      %494 = vmatpush1.xpose.msra.mxu0 0.0
      %495 = vmatprep.subr.mxu0 0.0
      %496 = vmatpush1.xpose.msra.mxu0 0.0
      %497 = vmatprep.subr.mxu0 0.0
      %498 = vmatpush1.xpose.msra.mxu0 0.0
      %499 = vmatprep.subr.mxu0 0.0
      %500 = vmatpush1.xpose.msra.mxu0 0.0
      %501 = vmatprep.subr.mxu0 0.0
      %502 = vmatpush1.xpose.msra.mxu0 0.0
      %503 = vmatprep.subr.mxu0 0.0
      %504 = vmatpush1.xpose.msra.mxu0 0.0
      %505 = vmatprep.mubr.f32.mxu0 0.0
      %506 = vmatmul.mubr.f32.gmra.mrb[0].mxu0 %v433
      %v507 = vpop.f32.mrb[0].mxu0
      %v508 = vadd.f32 0.0, %v507
      %v509 = vpop.f32.mrb[0].mxu0
      %510 = vdwg.mxu0
      %v511 = vld [vmem:[%s226] sm:$0xff]
      %v512 = vld [vmem:[%s4] sm:$0x1]
      %513 = vset.pattern.permute.xlu0 0
      %514 = vperm.xlu0 %513, %v511
      %v515 = vpop.permute.xlu0 %514
      %v516 = vlaneseq
      %v517 = vshrl.u32 %v516, 7
      %v518 = vsub.s32 0, %v517
      %v519 = vrot.slane %v512, %v518
      %vm520 = vcmp.eq.s32.totalorder %v515, %v519
      %v521 = vsel %vm520, 1, 0
      %v522 = vcvt.s32.f32 %v521
      %v523 = vld [vmem:[%s3] sm:$0x1]
      %v524 = vlaneseq
      %v525 = vshrl.u32 %v524, 7
      %v526 = vsub.s32 0, %v525
      %v527 = vrot.slane %v523, %v526
      %vm528 = vcmp.eq.s32.totalorder %v515, %v527
      %v529 = vld [vmem:[#allocation4] sm:$0xff]
      %v530 = vstv %s350
      %vm531 = vcmp.eq.s32.totalorder %v529, %v530
      %v532 = vsel %vm528, 1, 0
      %v533 = vcvt.s32.f32 %v532
      %v534 = vsel %vm531, 0.0, %v533
      %v535 = vsub.f32 %v508, 1e+09
      %v536 = vsel %vm531, %v535, %v508
      %vm537 = vcmask 130048
      %v538 = vsel %vm537, %v534, 0.0
      %539 = vadd.xlane.f32.xlu0 %v538
      %v540 = vpop.xlane.xlu0 %539
      %v541 = vmax.f32 %v540, 1.0
      %v542 = vrcp.pop %v541
      %v543 = vmul.f32 1.0, %v542
      %v544 = vld [vmem:[#allocation5] sm:$0xff]
      %v545 = vsel %vm537, %v536, -inf
      %546 = vmax.xlane.f32.xlu0 %v545
      %v547 = vpop.xlane.xlu0 %546
      %v548 = vsub.f32 %v536, %v547
      %v549 = vmul.f32 %v548, 1.442695
      %v550 = vpow.pop %v549
      %v551 = vsel %vm537, %v550, 0.0
      %552 = vadd.xlane.f32.xlu0 %v551
      %v553 = vpop.xlane.xlu0 %552
      %v554 = vlog2.pop %v553
      %v555 = vmul.f32 %v554, 0.6931472
      %v556 = vsub.f32 %v548, %v555
      %v557 = vmul.f32 %v534, %v556
      %v558 = vsel %vm537, %v557, 0.0
      %559 = vadd.xlane.f32.xlu0 %v558
      %v560 = vpop.xlane.xlu0 %559
      %v561 = vmul.f32 %v543, %v560
      %v562 = vadd.f32 %v544, %v561
      %vm563 = vcmask 7168
      %564 = vst.msk [vmem:[#allocation5] sm:$0xff] %vm563, %v562
      %vm565 = vcmask 64512
      %v566 = vsel %vm565, %v522, 0.0
      %567 = vadd.xlane.f32.xlu0 %v566
      %v568 = vpop.xlane.xlu0 %567
      %v569 = vmax.f32 %v568, 1.0
      %v570 = vrcp.pop %v569
      %v571 = vmul.f32 1.0, %v570
      %v572 = vld [vmem:[#allocation6] sm:$0xff]
      %v573 = vsel %vm565, %v427, -inf
      %574 = vmax.xlane.f32.xlu0 %v573
      %v575 = vpop.xlane.xlu0 %574
      %v576 = vsub.f32 %v427, %v575
      %v577 = vmul.f32 %v576, 1.442695
      %v578 = vpow.pop %v577
      %v579 = vsel %vm565, %v578, 0.0
      %580 = vadd.xlane.f32.xlu0 %v579
      %v581 = vpop.xlane.xlu0 %580
      %v582 = vlog2.pop %v581
      %v583 = vmul.f32 %v582, 0.6931472
      %v584 = vsub.f32 %v576, %v583
      %v585 = vmul.f32 %v522, %v584
      %v586 = vsel %vm565, %v585, 0.0
      %587 = vadd.xlane.f32.xlu0 %v586
      %v588 = vpop.xlane.xlu0 %587
      %v589 = vmul.f32 %v571, %v588
      %v590 = vadd.f32 %v572, %v589
      %591 = vst.msk [vmem:[#allocation6] sm:$0xff] %vm563, %v590
      %v592 = vld [vmem:[#allocation10] sm:$0x1]
      %v593 = vrot.slane %v566, 4
      %v594 = vadd.f32 %v566, %v593
      %v595 = vrot.slane %v594, 2
      %v596 = vadd.f32 %v594, %v595
      %v597 = vrot.slane %v596, 1
      %v598 = vadd.f32 %v596, %v597
      %v599 = vadd.f32 %v592, %v598
      %vm600 = vcmask 57344
      %601 = vst.msk [vmem:[#allocation10] sm:$0x1] %vm600, %v599
      %v602 = vld [vmem:[#allocation9] sm:$0x1]
      %v603 = vmul.f32 %v522, %v427
      %v604 = vsel %vm565, %v603, 0.0
      %v605 = vrot.slane %v604, 4
      %v606 = vadd.f32 %v604, %v605
      %v607 = vrot.slane %v606, 2
      %v608 = vadd.f32 %v606, %v607
      %v609 = vrot.slane %v608, 1
      %v610 = vadd.f32 %v608, %v609
      %v611 = vadd.f32 %v602, %v610
      %612 = vst.msk [vmem:[#allocation9] sm:$0x1] %vm600, %v611
      %v613 = vld [vmem:[#allocation7] sm:$0x1]
      %v614 = vrot.slane %v573, 4
      %v615 = vmax.f32 %v573, %v614
      %v616 = vrot.slane %v615, 2
      %v617 = vmax.f32 %v615, %v616
      %v618 = vrot.slane %v617, 1
      %v619 = vmax.f32 %v617, %v618
      %v620 = vmax.f32 %v613, %v619
      %v621 = vld [vmem:[#allocation8] sm:$0x1]
      %v622 = vsub.f32 %v613, %v620
      %v623 = vmul.f32 %v622, 1.442695
      %v624 = vpow.pop %v623
      %v625 = vmul.f32 %v621, %v624
      %v627 = vlaneseq
      %v628 = vshrl.u32 %v627, 7
      %v629 = vsub.s32 0, %v628
      %v630 = vrot.slane %v620, %v629
      %v632 = vsub.f32 %v427, %v630
      %v633 = vmul.f32 %v632, 1.442695
      %v634 = vpow.pop %v633
      %v635 = vsel %vm565, %v634, 0.0
      %v636 = vrot.slane %v635, 4
      %v637 = vadd.f32 %v635, %v636
      %v638 = vrot.slane %v637, 2
      %v639 = vadd.f32 %v637, %v638
      %v640 = vrot.slane %v639, 1
      %v641 = vadd.f32 %v639, %v640
      %v642 = vadd.f32 %v625, %v641
      %643 = vst.msk [vmem:[#allocation8] sm:$0x1] %vm600, %v642
      %644 = vst.msk [vmem:[#allocation7] sm:$0x1] %vm600, %v620
      %p645 = scmp.eq.s32.totalorder %s19, 1
      // Predicated region
      $region83: #{_multipos_call.1} parent=39 // pred_check
        %p646 = pneg %p645
      $region84: #{_multipos_call.1} parent=39 // pred_check_branch
        %648 = sbr.rel (%p646) target = $region86
      $region85: #{_multipos_call.1} parent=39 // pred_region
        %v649 = vld [vmem:[#allocation5] sm:$0xff]
        %v650 = vsel %vm563, %v649, 0.0
        %v651 = vrot.slane %v650, 4
        %v652 = vadd.f32 %v650, %v651
        %v653 = vrot.slane %v652, 2
        %v654 = vadd.f32 %v652, %v653
        %v655 = vrot.slane %v654, 1
        %v656 = vadd.f32 %v654, %v655
        %v657 = vld [vmem:[#allocation6] sm:$0xff]
        %v658 = vsel %vm563, %v657, 0.0
        %v659 = vrot.slane %v658, 4
        %v660 = vadd.f32 %v658, %v659
        %v661 = vrot.slane %v660, 2
        %v662 = vadd.f32 %v660, %v661
        %v663 = vrot.slane %v662, 1
        %v664 = vadd.f32 %v662, %v663
        %v665 = vmul.f32 %v656, -0.0625
        %v666 = vmul.f32 %v664, -0.0625
        %v667 = vld [vmem:[#allocation7] sm:$0x1]
        %v668 = vld [vmem:[#allocation8] sm:$0x1]
        %v669 = vlog2.pop %v668
        %v670 = vmul.f32 %v669, 0.6931472
        %v671 = vadd.f32 %v667, %v670
        %v672 = vld [vmem:[#allocation10] sm:$0x1]
        %v673 = vld [vmem:[#allocation9] sm:$0x1]
        %v674 = vmul.f32 %v672, %v671
        %v675 = vsub.f32 %v673, %v674
        %v676 = vmax.f32 %v672, 1.0
        %v677 = vrcp.pop %v676
        %v678 = vmul.f32 %v675, %v677
        %v679 = vsel %vm600, %v678, 0.0
        %680 = vadd.xlane.f32.xlu0 %v679
        %v681 = vpop.xlane.xlu0 %680
        %v682 = vmul.f32 %v681, -0.125
        %v683 = vadd.f32 %v666, %v682
        %v684 = vmul.f32 %v683, 0.5
        %v685 = vadd.f32 %v665, %v684
        %v686 = vlaneseq
        %v687 = vand.u32 %v686, 127
        %vm688 = vcmp.eq.s32.totalorder %v687, 0
        %vm689 = vcmp.eq.s32.totalorder %v687, 1
        %vm690 = vcmp.eq.s32.totalorder %v687, 2
        %692 = vset.pattern.permute.xlu0 0
        %693 = vperm.xlu0 %692, %v684
        %v694 = vpop.permute.xlu0 %693
        %v696 = vsel %vm690, %v694, 0.0
        %698 = vset.pattern.permute.xlu0 0
        %699 = vperm.xlu0 %698, %v665
        %v700 = vpop.permute.xlu0 %699
        %v702 = vsel %vm689, %v700, %v696
        %704 = vset.pattern.permute.xlu0 0
        %705 = vperm.xlu0 %704, %v685
        %v706 = vpop.permute.xlu0 %705
        %v708 = vsel %vm688, %v706, %v702
        %709 = vst [vmem:[%s7] sm:$0x1] %v708
      $region86: #{_multipos_call.1} parent=39 // pred_fallthru
        _
      // Predicated region
      $region87: #{_multipos_call.1} parent=39 // pred_check
        %p710 = pneg %p147
      $region88: #{_multipos_call.1} parent=39 // pred_check_branch
        %712 = sbr.rel (%p710) target = $region90
      $region89: #{_multipos_call.1} parent=39 // pred_region
        _
      $region90: #{_multipos_call.1} parent=39 // pred_fallthru
        _
      // Predicated region
      $region91: #{_multipos_call.1} parent=39 // pred_check
        %p713 = pneg %p147
      $region92: #{_multipos_call.1} parent=39 // pred_check_branch
        %715 = sbr.rel (%p713) target = $region94
      $region93: #{_multipos_call.1} parent=39 // pred_region
        _
      $region94: #{_multipos_call.1} parent=39 // pred_fallthru
        _
    $region40: #{_multipos_call.1} parent=5 // pred_fallthru
      _
    %p716 = scmp.le.s32.totalorder 2, %s14
    // Predicated region
    $region95: #{_multipos_call.1} parent=5 // pred_check
      %p717 = pneg %p716
    $region96: #{_multipos_call.1} parent=5 // pred_check_branch
      %719 = sbr.rel (%p717) target = $region98
    $region97: #{_multipos_call.1} parent=5 // pred_region
      %s720 = ssub.s32 %s14, 2
    $region98: #{_multipos_call.1} parent=5 // pred_fallthru
      _
  $region6: #{_multipos_call.1} parent=0 // loop_footer
    %s18 = sadd.s32 1, %s14
  $region7: #{_multipos_call.1} parent=0 // loop_footer_branch
    %13 = sbr.rel target = $region3
  $region8: #{_multipos_call.1} parent=0 // loop_exit
    _
  %721 = vsyncmov [#allocation11]
  %s722 = vpop.sfrf %721
  %p723 = scmp.eq.s32.totalorder %s722, 0
  %p724 = pneg %p723
  %726 = shalt.err (%p724)
  %s727 = scalar_lea.sflag [#allocation11], 1
  %728 = vsyncmov %s727
  %s729 = vpop.sfrf %728
  %p730 = scmp.eq.s32.totalorder %s729, 0
  %p731 = pneg %p730
  %733 = shalt.err (%p731)

</llo_original>
